<compile_context>
chip_gen: v7x
topology: tpu7x:2x2x1
jax: 0.10.0
libtpu: 0.0.40
codegen_flags: <defaults>
</compile_context>

<pallas_src>
import jax
import jax.numpy as jnp
from jax.experimental import pallas as pl
from jax.experimental.pallas import tpu as pltpu

_EPS = 1e-5

# (fc name, bn name or None, real in dim, real out dim) in forward order.
_CONFIG = [
    ("fc_e1", "batch_e1", 17, 128),
    ("fc_e2", "batch_e2", 128, 256),
    ("fc_e3", "batch_e3", 256, 512),
    ("fc_e4", "batch_e4", 512, 256),
    ("fc_e5", "batch_e5", 256, 128),
    ("fc1_2", "batch6_2", 128, 256),
    ("fc2_2", "batch7_2", 256, 128),
    ("fc3_2", None, 128, 1),
]

# Padded (lane/sublane aligned) dims used inside the kernel.
_PAD_IN = [128, 128, 256, 512, 256, 128, 256, 128]    # contraction dims
_PAD_OUT = [128, 256, 512, 256, 128, 256, 128, 128]   # output dims
_LAYER_DIMS = tuple(zip(_PAD_IN, _PAD_OUT))
_SLAB_W = 512                                         # lane width of both slabs
_W_ROWS = sum(_PAD_IN)                                # 1792
_N_BN = 7


def _edecoder_kernel(x_ref, w_ref, v_ref, out_ref):
    # x_ref:  (B, 128)  input padded with zeros beyond column 16
    # w_ref:  (1792, 512) packed transposed weights, zero-padded
    # v_ref:  (24, 512)  rows 0-7 biases, 8-15 BN gammas, 16-23 BN betas
    # out_ref:(B, 128)   only column 0 is the real fc3_2 output
    h = x_ref[...]
    woff = 0
    for li, (din, dout) in enumerate(_LAYER_DIMS):
        w = w_ref[woff:woff + din, :dout]                 # (din, dout)
        b = v_ref[li:li + 1, :dout]                       # (1, dout)
        h = jnp.dot(h, w, preferred_element_type=jnp.float32) + b
        woff += din
        if li < _N_BN:
            g = v_ref[8 + li:9 + li, :dout]               # (1, dout)
            be = v_ref[16 + li:17 + li, :dout]            # (1, dout)
            # training-mode BatchNorm1d over the batch dimension
            mean = jnp.mean(h, axis=0, keepdims=True)
            var = jnp.mean((h - mean) ** 2, axis=0, keepdims=True)
            h = (h - mean) * (g * jax.lax.rsqrt(var + _EPS)) + be
            h = jnp.maximum(h, 0.0)
    out_ref[...] = h


# ----------------------------- host-side glue -----------------------------

def init_params(key):
    """Deterministic synthetic parameters with the same shapes as the PyTorch module."""
    keys = iter(jax.random.split(key, 64))

    def u(shape, fan_in):
        bound = 1.0 / (fan_in ** 0.5)
        return jax.random.uniform(next(keys), shape, jnp.float32, -bound, bound)

    p = {}
    for fc, bn, din, dout in _CONFIG:
        p[f"{fc}_w"] = u((dout, din), din)                # PyTorch Linear: (out, in)
        p[f"{fc}_b"] = u((dout,), din)
        if bn is not None:
            p[f"{bn}_g"] = 1.0 + 0.1 * jax.random.normal(next(keys), (dout,), jnp.float32)
            p[f"{bn}_b"] = 0.1 * jax.random.normal(next(keys), (dout,), jnp.float32)
    return p


def _prep_kernel_params(params):
    """Pack all parameters into two contiguous, zero-padded f32 slabs."""
    w_slab = jnp.zeros((_W_ROWS, _SLAB_W), jnp.float32)
    v_slab = jnp.zeros((24, _SLAB_W), jnp.float32)
    off = 0
    for li, (fc, bn, din, dout) in enumerate(_CONFIG):
        w_t = params[f"{fc}_w"].astype(jnp.float32).T     # (din, dout)
        w_slab = w_slab.at[off:off + din, :dout].set(w_t)
        v_slab = v_slab.at[li, :dout].set(params[f"{fc}_b"].astype(jnp.float32))
        if bn is not None:
            v_slab = v_slab.at[8 + li, :dout].set(params[f"{bn}_g"].astype(jnp.float32))
            v_slab = v_slab.at[16 + li, :dout].set(params[f"{bn}_b"].astype(jnp.float32))
        off += _PAD_IN[li]
    return w_slab, v_slab


def edecoder_forward(x, params):
    """x: (B, 17) float. Returns a 1-tuple with the (B, 1) output (matches PyTorch)."""
    B = x.shape[0]
    x_pad = jnp.zeros((B, 128), jnp.float32).at[:, :17].set(x.astype(jnp.float32))
    w_slab, v_slab = _prep_kernel_params(params)

    vspec = pl.BlockSpec(memory_space=pltpu.MemorySpace.VMEM)
    out = pl.pallas_call(
        _edecoder_kernel,
        out_shape=jax.ShapeDtypeStruct((B, 128), jnp.float32),
        in_specs=[vspec, vspec, vspec],
        out_specs=vspec,
    )(x_pad, w_slab, v_slab)
    return (out[:, :1],)


if __name__ == "__main__":
    key = jax.random.PRNGKey(0)
    kx, kp = jax.random.split(key)

    B = 4                                # >=2 so training-mode BatchNorm is well defined
    x = jax.random.normal(kx, (B, 17), dtype=jnp.float32)
    params = init_params(kp)

    (y,) = edecoder_forward(x, params)
    jax.block_until_ready(y)
    assert y.shape == (B, 1)
    assert jnp.all(jnp.isfinite(y))
    print("KERNEL_OK")
</pallas_src>

<mosaic_0001>
module attributes {stable_mosaic.version = 11 : i64} {
  func.func @_edecoder_kernel(%arg0: memref<4x128xf32, #tpu.memory_space<vmem>>, %arg1: memref<1792x512xf32, #tpu.memory_space<vmem>>, %arg2: memref<24x512xf32, #tpu.memory_space<vmem>>, %arg3: memref<4x128xf32, #tpu.memory_space<vmem>>) attributes {dimension_semantics = [], scalar_prefetch = 0 : i64, scratch_operands = 0 : i64, tpu.core_type = #tpu.core_type<tc>} {
    %c0 = arith.constant 0 : index
    %c0_0 = arith.constant 0 : index
    %0 = vector.load %arg0[%c0, %c0_0] : memref<4x128xf32, #tpu.memory_space<vmem>>, vector<4x128xf32>
    %c0_1 = arith.constant 0 : index
    %c0_2 = arith.constant 0 : index
    %1 = vector.load %arg1[%c0_1, %c0_2] : memref<1792x512xf32, #tpu.memory_space<vmem>>, vector<128x128xf32>
    %c0_3 = arith.constant 0 : index
    %c0_4 = arith.constant 0 : index
    %2 = vector.load %arg2[%c0_3, %c0_4] : memref<24x512xf32, #tpu.memory_space<vmem>>, vector<1x128xf32>
    %cst = arith.constant dense<0.000000e+00> : vector<4x128xf32>
    %3 = tpu.matmul %0, %1, %cst {dimension_numbers = #tpu.dot_dimension_numbers<[1], [0], [0], [1], [0, 0, 1, 1], [], []>} : vector<4x128xf32>, vector<128x128xf32>, vector<4x128xf32> -> vector<4x128xf32>
    %4 = vector.broadcast %2 : vector<1x128xf32> to vector<4x128xf32>
    %5 = arith.addf %3, %4 : vector<4x128xf32>
    %c8 = arith.constant 8 : index
    %c0_5 = arith.constant 0 : index
    %6 = vector.load %arg2[%c8, %c0_5] : memref<24x512xf32, #tpu.memory_space<vmem>>, vector<1x128xf32>
    %c16 = arith.constant 16 : index
    %c0_6 = arith.constant 0 : index
    %7 = vector.load %arg2[%c16, %c0_6] : memref<24x512xf32, #tpu.memory_space<vmem>>, vector<1x128xf32>
    %cst_7 = arith.constant dense<0.000000e+00> : vector<128xf32>
    %8 = vector.multi_reduction <add>, %5, %cst_7 [0] : vector<4x128xf32> to vector<128xf32>
    %9 = vector.shape_cast %8 : vector<128xf32> to vector<1x128xf32>
    %cst_8 = arith.constant 4.000000e+00 : f32
    %10 = vector.broadcast %cst_8 : f32 to vector<1x128xf32>
    %11 = arith.divf %9, %10 : vector<1x128xf32>
    %12 = vector.broadcast %11 : vector<1x128xf32> to vector<4x128xf32>
    %13 = arith.subf %5, %12 : vector<4x128xf32>
    %14 = arith.mulf %13, %13 : vector<4x128xf32>
    %cst_9 = arith.constant dense<0.000000e+00> : vector<128xf32>
    %15 = vector.multi_reduction <add>, %14, %cst_9 [0] : vector<4x128xf32> to vector<128xf32>
    %16 = vector.shape_cast %15 : vector<128xf32> to vector<1x128xf32>
    %cst_10 = arith.constant 4.000000e+00 : f32
    %17 = vector.broadcast %cst_10 : f32 to vector<1x128xf32>
    %18 = arith.divf %16, %17 : vector<1x128xf32>
    %19 = vector.broadcast %11 : vector<1x128xf32> to vector<4x128xf32>
    %20 = arith.subf %5, %19 : vector<4x128xf32>
    %cst_11 = arith.constant 9.99999974E-6 : f32
    %21 = vector.broadcast %cst_11 : f32 to vector<1x128xf32>
    %22 = arith.addf %18, %21 : vector<1x128xf32>
    %23 = math.rsqrt %22 : vector<1x128xf32>
    %24 = arith.mulf %6, %23 : vector<1x128xf32>
    %25 = vector.broadcast %24 : vector<1x128xf32> to vector<4x128xf32>
    %26 = arith.mulf %20, %25 : vector<4x128xf32>
    %27 = vector.broadcast %7 : vector<1x128xf32> to vector<4x128xf32>
    %28 = arith.addf %26, %27 : vector<4x128xf32>
    %cst_12 = arith.constant 0.000000e+00 : f32
    %29 = vector.broadcast %cst_12 : f32 to vector<4x128xf32>
    %30 = arith.maximumf %28, %29 : vector<4x128xf32>
    %c128 = arith.constant 128 : index
    %c0_13 = arith.constant 0 : index
    %31 = vector.load %arg1[%c128, %c0_13] : memref<1792x512xf32, #tpu.memory_space<vmem>>, vector<128x256xf32>
    %c1 = arith.constant 1 : index
    %c0_14 = arith.constant 0 : index
    %32 = vector.load %arg2[%c1, %c0_14] : memref<24x512xf32, #tpu.memory_space<vmem>>, vector<1x256xf32>
    %cst_15 = arith.constant dense<0.000000e+00> : vector<4x256xf32>
    %33 = tpu.matmul %30, %31, %cst_15 {dimension_numbers = #tpu.dot_dimension_numbers<[1], [0], [0], [1], [0, 0, 1, 1], [], []>} : vector<4x128xf32>, vector<128x256xf32>, vector<4x256xf32> -> vector<4x256xf32>
    %34 = vector.broadcast %32 : vector<1x256xf32> to vector<4x256xf32>
    %35 = arith.addf %33, %34 : vector<4x256xf32>
    %c9 = arith.constant 9 : index
    %c0_16 = arith.constant 0 : index
    %36 = vector.load %arg2[%c9, %c0_16] : memref<24x512xf32, #tpu.memory_space<vmem>>, vector<1x256xf32>
    %c17 = arith.constant 17 : index
    %c0_17 = arith.constant 0 : index
    %37 = vector.load %arg2[%c17, %c0_17] : memref<24x512xf32, #tpu.memory_space<vmem>>, vector<1x256xf32>
    %cst_18 = arith.constant dense<0.000000e+00> : vector<256xf32>
    %38 = vector.multi_reduction <add>, %35, %cst_18 [0] : vector<4x256xf32> to vector<256xf32>
    %39 = vector.shape_cast %38 : vector<256xf32> to vector<1x256xf32>
    %cst_19 = arith.constant 4.000000e+00 : f32
    %40 = vector.broadcast %cst_19 : f32 to vector<1x256xf32>
    %41 = arith.divf %39, %40 : vector<1x256xf32>
    %42 = vector.broadcast %41 : vector<1x256xf32> to vector<4x256xf32>
    %43 = arith.subf %35, %42 : vector<4x256xf32>
    %44 = arith.mulf %43, %43 : vector<4x256xf32>
    %cst_20 = arith.constant dense<0.000000e+00> : vector<256xf32>
    %45 = vector.multi_reduction <add>, %44, %cst_20 [0] : vector<4x256xf32> to vector<256xf32>
    %46 = vector.shape_cast %45 : vector<256xf32> to vector<1x256xf32>
    %cst_21 = arith.constant 4.000000e+00 : f32
    %47 = vector.broadcast %cst_21 : f32 to vector<1x256xf32>
    %48 = arith.divf %46, %47 : vector<1x256xf32>
    %49 = vector.broadcast %41 : vector<1x256xf32> to vector<4x256xf32>
    %50 = arith.subf %35, %49 : vector<4x256xf32>
    %cst_22 = arith.constant 9.99999974E-6 : f32
    %51 = vector.broadcast %cst_22 : f32 to vector<1x256xf32>
    %52 = arith.addf %48, %51 : vector<1x256xf32>
    %53 = math.rsqrt %52 : vector<1x256xf32>
    %54 = arith.mulf %36, %53 : vector<1x256xf32>
    %55 = vector.broadcast %54 : vector<1x256xf32> to vector<4x256xf32>
    %56 = arith.mulf %50, %55 : vector<4x256xf32>
    %57 = vector.broadcast %37 : vector<1x256xf32> to vector<4x256xf32>
    %58 = arith.addf %56, %57 : vector<4x256xf32>
    %cst_23 = arith.constant 0.000000e+00 : f32
    %59 = vector.broadcast %cst_23 : f32 to vector<4x256xf32>
    %60 = arith.maximumf %58, %59 : vector<4x256xf32>
    %c256 = arith.constant 256 : index
    %c0_24 = arith.constant 0 : index
    %61 = vector.load %arg1[%c256, %c0_24] : memref<1792x512xf32, #tpu.memory_space<vmem>>, vector<256x512xf32>
    %c2 = arith.constant 2 : index
    %c0_25 = arith.constant 0 : index
    %62 = vector.load %arg2[%c2, %c0_25] : memref<24x512xf32, #tpu.memory_space<vmem>>, vector<1x512xf32>
    %cst_26 = arith.constant dense<0.000000e+00> : vector<4x512xf32>
    %63 = tpu.matmul %60, %61, %cst_26 {dimension_numbers = #tpu.dot_dimension_numbers<[1], [0], [0], [1], [0, 0, 1, 1], [], []>} : vector<4x256xf32>, vector<256x512xf32>, vector<4x512xf32> -> vector<4x512xf32>
    %64 = vector.broadcast %62 : vector<1x512xf32> to vector<4x512xf32>
    %65 = arith.addf %63, %64 : vector<4x512xf32>
    %c10 = arith.constant 10 : index
    %c0_27 = arith.constant 0 : index
    %66 = vector.load %arg2[%c10, %c0_27] : memref<24x512xf32, #tpu.memory_space<vmem>>, vector<1x512xf32>
    %c18 = arith.constant 18 : index
    %c0_28 = arith.constant 0 : index
    %67 = vector.load %arg2[%c18, %c0_28] : memref<24x512xf32, #tpu.memory_space<vmem>>, vector<1x512xf32>
    %cst_29 = arith.constant dense<0.000000e+00> : vector<512xf32>
    %68 = vector.multi_reduction <add>, %65, %cst_29 [0] : vector<4x512xf32> to vector<512xf32>
    %69 = vector.shape_cast %68 : vector<512xf32> to vector<1x512xf32>
    %cst_30 = arith.constant 4.000000e+00 : f32
    %70 = vector.broadcast %cst_30 : f32 to vector<1x512xf32>
    %71 = arith.divf %69, %70 : vector<1x512xf32>
    %72 = vector.broadcast %71 : vector<1x512xf32> to vector<4x512xf32>
    %73 = arith.subf %65, %72 : vector<4x512xf32>
    %74 = arith.mulf %73, %73 : vector<4x512xf32>
    %cst_31 = arith.constant dense<0.000000e+00> : vector<512xf32>
    %75 = vector.multi_reduction <add>, %74, %cst_31 [0] : vector<4x512xf32> to vector<512xf32>
    %76 = vector.shape_cast %75 : vector<512xf32> to vector<1x512xf32>
    %cst_32 = arith.constant 4.000000e+00 : f32
    %77 = vector.broadcast %cst_32 : f32 to vector<1x512xf32>
    %78 = arith.divf %76, %77 : vector<1x512xf32>
    %79 = vector.broadcast %71 : vector<1x512xf32> to vector<4x512xf32>
    %80 = arith.subf %65, %79 : vector<4x512xf32>
    %cst_33 = arith.constant 9.99999974E-6 : f32
    %81 = vector.broadcast %cst_33 : f32 to vector<1x512xf32>
    %82 = arith.addf %78, %81 : vector<1x512xf32>
    %83 = math.rsqrt %82 : vector<1x512xf32>
    %84 = arith.mulf %66, %83 : vector<1x512xf32>
    %85 = vector.broadcast %84 : vector<1x512xf32> to vector<4x512xf32>
    %86 = arith.mulf %80, %85 : vector<4x512xf32>
    %87 = vector.broadcast %67 : vector<1x512xf32> to vector<4x512xf32>
    %88 = arith.addf %86, %87 : vector<4x512xf32>
    %cst_34 = arith.constant 0.000000e+00 : f32
    %89 = vector.broadcast %cst_34 : f32 to vector<4x512xf32>
    %90 = arith.maximumf %88, %89 : vector<4x512xf32>
    %c512 = arith.constant 512 : index
    %c0_35 = arith.constant 0 : index
    %91 = vector.load %arg1[%c512, %c0_35] : memref<1792x512xf32, #tpu.memory_space<vmem>>, vector<512x256xf32>
    %c3 = arith.constant 3 : index
    %c0_36 = arith.constant 0 : index
    %92 = vector.load %arg2[%c3, %c0_36] : memref<24x512xf32, #tpu.memory_space<vmem>>, vector<1x256xf32>
    %cst_37 = arith.constant dense<0.000000e+00> : vector<4x256xf32>
    %93 = tpu.matmul %90, %91, %cst_37 {dimension_numbers = #tpu.dot_dimension_numbers<[1], [0], [0], [1], [0, 0, 1, 1], [], []>} : vector<4x512xf32>, vector<512x256xf32>, vector<4x256xf32> -> vector<4x256xf32>
    %94 = vector.broadcast %92 : vector<1x256xf32> to vector<4x256xf32>
    %95 = arith.addf %93, %94 : vector<4x256xf32>
    %c11 = arith.constant 11 : index
    %c0_38 = arith.constant 0 : index
    %96 = vector.load %arg2[%c11, %c0_38] : memref<24x512xf32, #tpu.memory_space<vmem>>, vector<1x256xf32>
    %c19 = arith.constant 19 : index
    %c0_39 = arith.constant 0 : index
    %97 = vector.load %arg2[%c19, %c0_39] : memref<24x512xf32, #tpu.memory_space<vmem>>, vector<1x256xf32>
    %cst_40 = arith.constant dense<0.000000e+00> : vector<256xf32>
    %98 = vector.multi_reduction <add>, %95, %cst_40 [0] : vector<4x256xf32> to vector<256xf32>
    %99 = vector.shape_cast %98 : vector<256xf32> to vector<1x256xf32>
    %cst_41 = arith.constant 4.000000e+00 : f32
    %100 = vector.broadcast %cst_41 : f32 to vector<1x256xf32>
    %101 = arith.divf %99, %100 : vector<1x256xf32>
    %102 = vector.broadcast %101 : vector<1x256xf32> to vector<4x256xf32>
    %103 = arith.subf %95, %102 : vector<4x256xf32>
    %104 = arith.mulf %103, %103 : vector<4x256xf32>
    %cst_42 = arith.constant dense<0.000000e+00> : vector<256xf32>
    %105 = vector.multi_reduction <add>, %104, %cst_42 [0] : vector<4x256xf32> to vector<256xf32>
    %106 = vector.shape_cast %105 : vector<256xf32> to vector<1x256xf32>
    %cst_43 = arith.constant 4.000000e+00 : f32
    %107 = vector.broadcast %cst_43 : f32 to vector<1x256xf32>
    %108 = arith.divf %106, %107 : vector<1x256xf32>
    %109 = vector.broadcast %101 : vector<1x256xf32> to vector<4x256xf32>
    %110 = arith.subf %95, %109 : vector<4x256xf32>
    %cst_44 = arith.constant 9.99999974E-6 : f32
    %111 = vector.broadcast %cst_44 : f32 to vector<1x256xf32>
    %112 = arith.addf %108, %111 : vector<1x256xf32>
    %113 = math.rsqrt %112 : vector<1x256xf32>
    %114 = arith.mulf %96, %113 : vector<1x256xf32>
    %115 = vector.broadcast %114 : vector<1x256xf32> to vector<4x256xf32>
    %116 = arith.mulf %110, %115 : vector<4x256xf32>
    %117 = vector.broadcast %97 : vector<1x256xf32> to vector<4x256xf32>
    %118 = arith.addf %116, %117 : vector<4x256xf32>
    %cst_45 = arith.constant 0.000000e+00 : f32
    %119 = vector.broadcast %cst_45 : f32 to vector<4x256xf32>
    %120 = arith.maximumf %118, %119 : vector<4x256xf32>
    %c1024 = arith.constant 1024 : index
    %c0_46 = arith.constant 0 : index
    %121 = vector.load %arg1[%c1024, %c0_46] : memref<1792x512xf32, #tpu.memory_space<vmem>>, vector<256x128xf32>
    %c4 = arith.constant 4 : index
    %c0_47 = arith.constant 0 : index
    %122 = vector.load %arg2[%c4, %c0_47] : memref<24x512xf32, #tpu.memory_space<vmem>>, vector<1x128xf32>
    %cst_48 = arith.constant dense<0.000000e+00> : vector<4x128xf32>
    %123 = tpu.matmul %120, %121, %cst_48 {dimension_numbers = #tpu.dot_dimension_numbers<[1], [0], [0], [1], [0, 0, 1, 1], [], []>} : vector<4x256xf32>, vector<256x128xf32>, vector<4x128xf32> -> vector<4x128xf32>
    %124 = vector.broadcast %122 : vector<1x128xf32> to vector<4x128xf32>
    %125 = arith.addf %123, %124 : vector<4x128xf32>
    %c12 = arith.constant 12 : index
    %c0_49 = arith.constant 0 : index
    %126 = vector.load %arg2[%c12, %c0_49] : memref<24x512xf32, #tpu.memory_space<vmem>>, vector<1x128xf32>
    %c20 = arith.constant 20 : index
    %c0_50 = arith.constant 0 : index
    %127 = vector.load %arg2[%c20, %c0_50] : memref<24x512xf32, #tpu.memory_space<vmem>>, vector<1x128xf32>
    %cst_51 = arith.constant dense<0.000000e+00> : vector<128xf32>
    %128 = vector.multi_reduction <add>, %125, %cst_51 [0] : vector<4x128xf32> to vector<128xf32>
    %129 = vector.shape_cast %128 : vector<128xf32> to vector<1x128xf32>
    %cst_52 = arith.constant 4.000000e+00 : f32
    %130 = vector.broadcast %cst_52 : f32 to vector<1x128xf32>
    %131 = arith.divf %129, %130 : vector<1x128xf32>
    %132 = vector.broadcast %131 : vector<1x128xf32> to vector<4x128xf32>
    %133 = arith.subf %125, %132 : vector<4x128xf32>
    %134 = arith.mulf %133, %133 : vector<4x128xf32>
    %cst_53 = arith.constant dense<0.000000e+00> : vector<128xf32>
    %135 = vector.multi_reduction <add>, %134, %cst_53 [0] : vector<4x128xf32> to vector<128xf32>
    %136 = vector.shape_cast %135 : vector<128xf32> to vector<1x128xf32>
    %cst_54 = arith.constant 4.000000e+00 : f32
    %137 = vector.broadcast %cst_54 : f32 to vector<1x128xf32>
    %138 = arith.divf %136, %137 : vector<1x128xf32>
    %139 = vector.broadcast %131 : vector<1x128xf32> to vector<4x128xf32>
    %140 = arith.subf %125, %139 : vector<4x128xf32>
    %cst_55 = arith.constant 9.99999974E-6 : f32
    %141 = vector.broadcast %cst_55 : f32 to vector<1x128xf32>
    %142 = arith.addf %138, %141 : vector<1x128xf32>
    %143 = math.rsqrt %142 : vector<1x128xf32>
    %144 = arith.mulf %126, %143 : vector<1x128xf32>
    %145 = vector.broadcast %144 : vector<1x128xf32> to vector<4x128xf32>
    %146 = arith.mulf %140, %145 : vector<4x128xf32>
    %147 = vector.broadcast %127 : vector<1x128xf32> to vector<4x128xf32>
    %148 = arith.addf %146, %147 : vector<4x128xf32>
    %cst_56 = arith.constant 0.000000e+00 : f32
    %149 = vector.broadcast %cst_56 : f32 to vector<4x128xf32>
    %150 = arith.maximumf %148, %149 : vector<4x128xf32>
    %c1280 = arith.constant 1280 : index
    %c0_57 = arith.constant 0 : index
    %151 = vector.load %arg1[%c1280, %c0_57] : memref<1792x512xf32, #tpu.memory_space<vmem>>, vector<128x256xf32>
    %c5 = arith.constant 5 : index
    %c0_58 = arith.constant 0 : index
    %152 = vector.load %arg2[%c5, %c0_58] : memref<24x512xf32, #tpu.memory_space<vmem>>, vector<1x256xf32>
    %cst_59 = arith.constant dense<0.000000e+00> : vector<4x256xf32>
    %153 = tpu.matmul %150, %151, %cst_59 {dimension_numbers = #tpu.dot_dimension_numbers<[1], [0], [0], [1], [0, 0, 1, 1], [], []>} : vector<4x128xf32>, vector<128x256xf32>, vector<4x256xf32> -> vector<4x256xf32>
    %154 = vector.broadcast %152 : vector<1x256xf32> to vector<4x256xf32>
    %155 = arith.addf %153, %154 : vector<4x256xf32>
    %c13 = arith.constant 13 : index
    %c0_60 = arith.constant 0 : index
    %156 = vector.load %arg2[%c13, %c0_60] : memref<24x512xf32, #tpu.memory_space<vmem>>, vector<1x256xf32>
    %c21 = arith.constant 21 : index
    %c0_61 = arith.constant 0 : index
    %157 = vector.load %arg2[%c21, %c0_61] : memref<24x512xf32, #tpu.memory_space<vmem>>, vector<1x256xf32>
    %cst_62 = arith.constant dense<0.000000e+00> : vector<256xf32>
    %158 = vector.multi_reduction <add>, %155, %cst_62 [0] : vector<4x256xf32> to vector<256xf32>
    %159 = vector.shape_cast %158 : vector<256xf32> to vector<1x256xf32>
    %cst_63 = arith.constant 4.000000e+00 : f32
    %160 = vector.broadcast %cst_63 : f32 to vector<1x256xf32>
    %161 = arith.divf %159, %160 : vector<1x256xf32>
    %162 = vector.broadcast %161 : vector<1x256xf32> to vector<4x256xf32>
    %163 = arith.subf %155, %162 : vector<4x256xf32>
    %164 = arith.mulf %163, %163 : vector<4x256xf32>
    %cst_64 = arith.constant dense<0.000000e+00> : vector<256xf32>
    %165 = vector.multi_reduction <add>, %164, %cst_64 [0] : vector<4x256xf32> to vector<256xf32>
    %166 = vector.shape_cast %165 : vector<256xf32> to vector<1x256xf32>
    %cst_65 = arith.constant 4.000000e+00 : f32
    %167 = vector.broadcast %cst_65 : f32 to vector<1x256xf32>
    %168 = arith.divf %166, %167 : vector<1x256xf32>
    %169 = vector.broadcast %161 : vector<1x256xf32> to vector<4x256xf32>
    %170 = arith.subf %155, %169 : vector<4x256xf32>
    %cst_66 = arith.constant 9.99999974E-6 : f32
    %171 = vector.broadcast %cst_66 : f32 to vector<1x256xf32>
    %172 = arith.addf %168, %171 : vector<1x256xf32>
    %173 = math.rsqrt %172 : vector<1x256xf32>
    %174 = arith.mulf %156, %173 : vector<1x256xf32>
    %175 = vector.broadcast %174 : vector<1x256xf32> to vector<4x256xf32>
    %176 = arith.mulf %170, %175 : vector<4x256xf32>
    %177 = vector.broadcast %157 : vector<1x256xf32> to vector<4x256xf32>
    %178 = arith.addf %176, %177 : vector<4x256xf32>
    %cst_67 = arith.constant 0.000000e+00 : f32
    %179 = vector.broadcast %cst_67 : f32 to vector<4x256xf32>
    %180 = arith.maximumf %178, %179 : vector<4x256xf32>
    %c1408 = arith.constant 1408 : index
    %c0_68 = arith.constant 0 : index
    %181 = vector.load %arg1[%c1408, %c0_68] : memref<1792x512xf32, #tpu.memory_space<vmem>>, vector<256x128xf32>
    %c6 = arith.constant 6 : index
    %c0_69 = arith.constant 0 : index
    %182 = vector.load %arg2[%c6, %c0_69] : memref<24x512xf32, #tpu.memory_space<vmem>>, vector<1x128xf32>
    %cst_70 = arith.constant dense<0.000000e+00> : vector<4x128xf32>
    %183 = tpu.matmul %180, %181, %cst_70 {dimension_numbers = #tpu.dot_dimension_numbers<[1], [0], [0], [1], [0, 0, 1, 1], [], []>} : vector<4x256xf32>, vector<256x128xf32>, vector<4x128xf32> -> vector<4x128xf32>
    %184 = vector.broadcast %182 : vector<1x128xf32> to vector<4x128xf32>
    %185 = arith.addf %183, %184 : vector<4x128xf32>
    %c14 = arith.constant 14 : index
    %c0_71 = arith.constant 0 : index
    %186 = vector.load %arg2[%c14, %c0_71] : memref<24x512xf32, #tpu.memory_space<vmem>>, vector<1x128xf32>
    %c22 = arith.constant 22 : index
    %c0_72 = arith.constant 0 : index
    %187 = vector.load %arg2[%c22, %c0_72] : memref<24x512xf32, #tpu.memory_space<vmem>>, vector<1x128xf32>
    %cst_73 = arith.constant dense<0.000000e+00> : vector<128xf32>
    %188 = vector.multi_reduction <add>, %185, %cst_73 [0] : vector<4x128xf32> to vector<128xf32>
    %189 = vector.shape_cast %188 : vector<128xf32> to vector<1x128xf32>
    %cst_74 = arith.constant 4.000000e+00 : f32
    %190 = vector.broadcast %cst_74 : f32 to vector<1x128xf32>
    %191 = arith.divf %189, %190 : vector<1x128xf32>
    %192 = vector.broadcast %191 : vector<1x128xf32> to vector<4x128xf32>
    %193 = arith.subf %185, %192 : vector<4x128xf32>
    %194 = arith.mulf %193, %193 : vector<4x128xf32>
    %cst_75 = arith.constant dense<0.000000e+00> : vector<128xf32>
    %195 = vector.multi_reduction <add>, %194, %cst_75 [0] : vector<4x128xf32> to vector<128xf32>
    %196 = vector.shape_cast %195 : vector<128xf32> to vector<1x128xf32>
    %cst_76 = arith.constant 4.000000e+00 : f32
    %197 = vector.broadcast %cst_76 : f32 to vector<1x128xf32>
    %198 = arith.divf %196, %197 : vector<1x128xf32>
    %199 = vector.broadcast %191 : vector<1x128xf32> to vector<4x128xf32>
    %200 = arith.subf %185, %199 : vector<4x128xf32>
    %cst_77 = arith.constant 9.99999974E-6 : f32
    %201 = vector.broadcast %cst_77 : f32 to vector<1x128xf32>
    %202 = arith.addf %198, %201 : vector<1x128xf32>
    %203 = math.rsqrt %202 : vector<1x128xf32>
    %204 = arith.mulf %186, %203 : vector<1x128xf32>
    %205 = vector.broadcast %204 : vector<1x128xf32> to vector<4x128xf32>
    %206 = arith.mulf %200, %205 : vector<4x128xf32>
    %207 = vector.broadcast %187 : vector<1x128xf32> to vector<4x128xf32>
    %208 = arith.addf %206, %207 : vector<4x128xf32>
    %cst_78 = arith.constant 0.000000e+00 : f32
    %209 = vector.broadcast %cst_78 : f32 to vector<4x128xf32>
    %210 = arith.maximumf %208, %209 : vector<4x128xf32>
    %c1664 = arith.constant 1664 : index
    %c0_79 = arith.constant 0 : index
    %211 = vector.load %arg1[%c1664, %c0_79] : memref<1792x512xf32, #tpu.memory_space<vmem>>, vector<128x128xf32>
    %c7 = arith.constant 7 : index
    %c0_80 = arith.constant 0 : index
    %212 = vector.load %arg2[%c7, %c0_80] : memref<24x512xf32, #tpu.memory_space<vmem>>, vector<1x128xf32>
    %cst_81 = arith.constant dense<0.000000e+00> : vector<4x128xf32>
    %213 = tpu.matmul %210, %211, %cst_81 {dimension_numbers = #tpu.dot_dimension_numbers<[1], [0], [0], [1], [0, 0, 1, 1], [], []>} : vector<4x128xf32>, vector<128x128xf32>, vector<4x128xf32> -> vector<4x128xf32>
    %214 = vector.broadcast %212 : vector<1x128xf32> to vector<4x128xf32>
    %215 = arith.addf %213, %214 : vector<4x128xf32>
    %c0_82 = arith.constant 0 : index
    %c0_83 = arith.constant 0 : index
    %216 = vector.load %arg3[%c0_82, %c0_83] : memref<4x128xf32, #tpu.memory_space<vmem>>, vector<4x128xf32>
    tpu.vector_store %arg3[%c0_82, %c0_83], %215 {strides = array<i32>} : memref<4x128xf32, #tpu.memory_space<vmem>>, vector<4x128xf32>,
    return
  }
}

</mosaic_0001>

<llo_original>
// kernel: tpu_custom_call.1
$region0: #{tpu_custom_call.1}
  #allocation0 [shape = 'u32[]', space=smem, size = 0x4, offset = 0x4, fixed_abs, tag = 'smem constant byte address 0x4 - core index']
  #allocation1 [shape = 'u32[144,128]{1,0:T(1,128)}', space=vmem, size = 0x12000, scoped, tag = 'internal scratch']
  %s0 = inlined_call_operand.hbm [shape: f32[4,128], index: 0, kind: input, shape index: {}]
  %s1 = inlined_call_operand.hbm [shape: f32[1792,512], index: 1, kind: input, shape index: {}]
  %s2 = inlined_call_operand.hbm [shape: f32[24,512], index: 2, kind: input, shape index: {}]
  %s3 = inlined_call_operand.hbm [shape: f32[4,128], index: 3, kind: output, shape index: {}]
  %s4 = sld [smem:[#allocation0]]
  $region34: #{tpu_custom_call.1} parent=0
    _
  %s6 = ssub.s32 1, %s4
  %s7 = scalar_select 0, %s6, %s4
  $region1: #{tpu_custom_call.1} parent=0
    #allocation2 [shape = 'u8[2048]{0}', space=vmem, size = 0x800, scoped, tag = 'input window, operand 0, single buffered']
    #allocation3 [shape = 's32[1]{0}', space=sflag, size = 0x4, scoped, tag = 'scoped memory for tpu_custom_call.1']
    #allocation4 [shape = 's32[1]{0}', space=sflag, size = 0x4, scoped, tag = 'scoped memory for tpu_custom_call.1']
    #allocation5 [shape = 'u8[3670016]{0}', space=vmem, size = 0x380000, scoped, tag = 'input window, operand 1, single buffered']
    #allocation6 [shape = 's32[1]{0}', space=sflag, size = 0x4, scoped, tag = 'scoped memory for tpu_custom_call.1']
    #allocation7 [shape = 'u8[49152]{0}', space=vmem, size = 0xc000, scoped, tag = 'input window, operand 2, single buffered']
    #allocation8 [shape = 'u8[2048]{0}', space=vmem, size = 0x800, scoped, tag = 'output window, operand 0, single buffered']
    %8 = vsyncpa [#allocation3], 0
    %9 = vsyncpa [#allocation6], 0
    %10 = vsyncpa [#allocation4], 0
    // Predicated region
    $region2: #{tpu_custom_call.1} parent=1 // pred_check
      _
    $region3: #{tpu_custom_call.1} parent=1 // pred_check_branch
      %12 = sbr.rel (0) target = $region5
    $region4: #{tpu_custom_call.1} parent=1 // pred_region
      %s14 = ssub.s32 64, 64
      %15 = vsyncadd [#allocation3], %s14
      %s17 = sshll.u32 [#allocation2], 4
      %s18 = int_to_ptr.vmem [resolvable:$true] %s17
      %20 = dma.hbm_to_vmem [thread:$0]  %s0, 64, %s18, [#allocation3]
    $region5: #{tpu_custom_call.1} parent=1 // pred_fallthru
      _
    // Predicated region
    $region6: #{tpu_custom_call.1} parent=1 // pred_check
      _
    $region7: #{tpu_custom_call.1} parent=1 // pred_check_branch
      %22 = sbr.rel (0) target = $region9
    $region8: #{tpu_custom_call.1} parent=1 // pred_region
      %s24 = ssub.s32 114688, 114688
      %25 = vsyncadd [#allocation6], %s24
      %s26 = sshll.u32 [#allocation5], 4
      %s27 = int_to_ptr.vmem [resolvable:$true] %s26
      %32 = dma.hbm_to_vmem [thread:$0]  %s1, 114688, %s27, [#allocation6], 512, 512, 32
    $region9: #{tpu_custom_call.1} parent=1 // pred_fallthru
      _
    // Predicated region
    $region10: #{tpu_custom_call.1} parent=1 // pred_check
      _
    $region11: #{tpu_custom_call.1} parent=1 // pred_check_branch
      %34 = sbr.rel (0) target = $region13
    $region12: #{tpu_custom_call.1} parent=1 // pred_region
      %s36 = ssub.s32 1536, 1536
      %37 = vsyncadd [#allocation6], %s36
      %s38 = sshll.u32 [#allocation7], 4
      %s39 = int_to_ptr.vmem [resolvable:$true] %s38
      %44 = dma.hbm_to_vmem [thread:$0]  %s2, 1536, %s39, [#allocation6], 512, 512, 32
    $region13: #{tpu_custom_call.1} parent=1 // pred_fallthru
      _
    // Predicated region
    $region14: #{tpu_custom_call.1} parent=1 // pred_check
      _
    $region15: #{tpu_custom_call.1} parent=1 // pred_check_branch
      %46 = sbr.rel (0) target = $region17
    $region16: #{tpu_custom_call.1} parent=1 // pred_region
      %47 = dma.done [#allocation3], 64
    $region17: #{tpu_custom_call.1} parent=1 // pred_fallthru
      _
    // Predicated region
    $region18: #{tpu_custom_call.1} parent=1 // pred_check
      _
    $region19: #{tpu_custom_call.1} parent=1 // pred_check_branch
      %49 = sbr.rel (0) target = $region21
    $region20: #{tpu_custom_call.1} parent=1 // pred_region
      %50 = dma.done [#allocation6], 114688
    $region21: #{tpu_custom_call.1} parent=1 // pred_fallthru
      _
    // Predicated region
    $region22: #{tpu_custom_call.1} parent=1 // pred_check
      _
    $region23: #{tpu_custom_call.1} parent=1 // pred_check_branch
      %52 = sbr.rel (0) target = $region25
    $region24: #{tpu_custom_call.1} parent=1 // pred_region
      %53 = dma.done [#allocation6], 1536
    $region25: #{tpu_custom_call.1} parent=1 // pred_fallthru
      _
    %v54 = vld [vmem:[#allocation2] sm:$0xf]
    %v55 = vld [vmem:[#allocation5] sm:$0xff]
    %v56 = vld [vmem:[#allocation5 + $0x20] sm:$0xff]
    %v57 = vld [vmem:[#allocation5 + $0x40] sm:$0xff]
    %v58 = vld [vmem:[#allocation5 + $0x60] sm:$0xff]
    %v59 = vld [vmem:[#allocation5 + $0x80] sm:$0xff]
    %v60 = vld [vmem:[#allocation5 + $0xa0] sm:$0xff]
    %v61 = vld [vmem:[#allocation5 + $0xc0] sm:$0xff]
    %v62 = vld [vmem:[#allocation5 + $0xe0] sm:$0xff]
    %v63 = vld [vmem:[#allocation5 + $0x100] sm:$0xff]
    %v64 = vld [vmem:[#allocation5 + $0x120] sm:$0xff]
    %v65 = vld [vmem:[#allocation5 + $0x140] sm:$0xff]
    %v66 = vld [vmem:[#allocation5 + $0x160] sm:$0xff]
    %v67 = vld [vmem:[#allocation5 + $0x180] sm:$0xff]
    %v68 = vld [vmem:[#allocation5 + $0x1a0] sm:$0xff]
    %v69 = vld [vmem:[#allocation5 + $0x1c0] sm:$0xff]
    %v70 = vld [vmem:[#allocation5 + $0x1e0] sm:$0xff]
    %v71 = vld [vmem:[#allocation7] ss:$0 sm:$0xff]
    %72 = vmatprep.subr.mxu0 0.0
    %73 = vmatpush1.msra.mxu0 %v55
    %74 = vmatprep.subr.mxu0 0.0
    %75 = vmatpush1.msra.mxu0 %v56
    %76 = vmatprep.subr.mxu0 0.0
    %77 = vmatpush1.msra.mxu0 %v57
    %78 = vmatprep.subr.mxu0 0.0
    %79 = vmatpush1.msra.mxu0 %v58
    %80 = vmatprep.subr.mxu0 0.0
    %81 = vmatpush1.msra.mxu0 %v59
    %82 = vmatprep.subr.mxu0 0.0
    %83 = vmatpush1.msra.mxu0 %v60
    %84 = vmatprep.subr.mxu0 0.0
    %85 = vmatpush1.msra.mxu0 %v61
    %86 = vmatprep.subr.mxu0 0.0
    %87 = vmatpush1.msra.mxu0 %v62
    %88 = vmatprep.subr.mxu0 0.0
    %89 = vmatpush1.msra.mxu0 %v63
    %90 = vmatprep.subr.mxu0 0.0
    %91 = vmatpush1.msra.mxu0 %v64
    %92 = vmatprep.subr.mxu0 0.0
    %93 = vmatpush1.msra.mxu0 %v65
    %94 = vmatprep.subr.mxu0 0.0
    %95 = vmatpush1.msra.mxu0 %v66
    %96 = vmatprep.subr.mxu0 0.0
    %97 = vmatpush1.msra.mxu0 %v67
    %98 = vmatprep.subr.mxu0 0.0
    %99 = vmatpush1.msra.mxu0 %v68
    %100 = vmatprep.subr.mxu0 0.0
    %101 = vmatpush1.msra.mxu0 %v69
    %102 = vmatprep.subr.mxu0 0.0
    %103 = vmatpush1.msra.mxu0 %v70
    %104 = vmatprep.subr.mxu0 0.0
    %105 = vmatpush1.msra.mxu0 0.0
    %106 = vmatprep.subr.mxu0 0.0
    %107 = vmatpush1.msra.mxu0 0.0
    %108 = vmatprep.subr.mxu0 0.0
    %109 = vmatpush1.msra.mxu0 0.0
    %110 = vmatprep.subr.mxu0 0.0
    %111 = vmatpush1.msra.mxu0 0.0
    %112 = vmatprep.subr.mxu0 0.0
    %113 = vmatpush1.msra.mxu0 0.0
    %114 = vmatprep.subr.mxu0 0.0
    %115 = vmatpush1.msra.mxu0 0.0
    %116 = vmatprep.subr.mxu0 0.0
    %117 = vmatpush1.msra.mxu0 0.0
    %118 = vmatprep.subr.mxu0 0.0
    %119 = vmatpush1.msra.mxu0 0.0
    %120 = vmatprep.subr.mxu0 0.0
    %121 = vmatpush1.msra.mxu0 0.0
    %122 = vmatprep.subr.mxu0 0.0
    %123 = vmatpush1.msra.mxu0 0.0
    %124 = vmatprep.subr.mxu0 0.0
    %125 = vmatpush1.msra.mxu0 0.0
    %126 = vmatprep.subr.mxu0 0.0
    %127 = vmatpush1.msra.mxu0 0.0
    %128 = vmatprep.subr.mxu0 0.0
    %129 = vmatpush1.msra.mxu0 0.0
    %130 = vmatprep.subr.mxu0 0.0
    %131 = vmatpush1.msra.mxu0 0.0
    %132 = vmatprep.subr.mxu0 0.0
    %133 = vmatpush1.msra.mxu0 0.0
    %134 = vmatprep.subr.mxu0 0.0
    %135 = vmatpush1.msra.mxu0 0.0
    %136 = vmatprep.mubr.f32.mxu0 0.0
    %137 = vmatmul.mubr.f32.gmra.mrb[0].mxu0 %v54
    %v138 = vpop.f32.mrb[0].mxu0
    %v139 = vadd.f32 %v71, %v138
    %v140 = vpop.f32.mrb[0].mxu0
    %141 = vdwg.mxu0
    %v142 = vld [vmem:[#allocation7 + $0x20] ss:$0 sm:$0xff]
    %v143 = vld [vmem:[#allocation7 + $0x40] ss:$0 sm:$0xff]
    %vm144 = vcmask 1043456
    %v145 = vsel %vm144, %v139, 0.0
    %v146 = vrot.slane %v145, 4
    %v147 = vadd.f32 %v145, %v146
    %v148 = vrot.slane %v147, 2
    %v149 = vadd.f32 %v147, %v148
    %v150 = vrot.slane %v149, 1
    %v151 = vadd.f32 %v149, %v150
    %v152 = vrcp.pop 4.0
    %v153 = vmul.f32 %v151, %v152
    %v154 = vsub.f32 %v139, %v153
    %v155 = vmul.f32 %v154, %v154
    %v156 = vsel %vm144, %v155, 0.0
    %v157 = vrot.slane %v156, 4
    %v158 = vadd.f32 %v156, %v157
    %v159 = vrot.slane %v158, 2
    %v160 = vadd.f32 %v158, %v159
    %v161 = vrot.slane %v160, 1
    %v162 = vadd.f32 %v160, %v161
    %v163 = vmul.f32 %v162, %v152
    %v164 = vadd.f32 %v163, 1e-05
    %v165 = vrsqrt.pop %v164
    %v166 = vmul.f32 %v142, %v165
    %v167 = vmul.f32 %v154, %v166
    %v168 = vadd.f32 %v167, %v143
    %v169 = vmax.f32 %v168, 0.0
    %v170 = vld [vmem:[#allocation5 + $0x200] sm:$0xff]
    %v171 = vld [vmem:[#allocation5 + $0x208] sm:$0xff]
    %v172 = vld [vmem:[#allocation5 + $0x220] sm:$0xff]
    %v173 = vld [vmem:[#allocation5 + $0x228] sm:$0xff]
    %v174 = vld [vmem:[#allocation5 + $0x240] sm:$0xff]
    %v175 = vld [vmem:[#allocation5 + $0x248] sm:$0xff]
    %v176 = vld [vmem:[#allocation5 + $0x260] sm:$0xff]
    %v177 = vld [vmem:[#allocation5 + $0x268] sm:$0xff]
    %v178 = vld [vmem:[#allocation5 + $0x280] sm:$0xff]
    %v179 = vld [vmem:[#allocation5 + $0x288] sm:$0xff]
    %v180 = vld [vmem:[#allocation5 + $0x2a0] sm:$0xff]
    %v181 = vld [vmem:[#allocation5 + $0x2a8] sm:$0xff]
    %v182 = vld [vmem:[#allocation5 + $0x2c0] sm:$0xff]
    %v183 = vld [vmem:[#allocation5 + $0x2c8] sm:$0xff]
    %v184 = vld [vmem:[#allocation5 + $0x2e0] sm:$0xff]
    %v185 = vld [vmem:[#allocation5 + $0x2e8] sm:$0xff]
    %v186 = vld [vmem:[#allocation5 + $0x300] sm:$0xff]
    %v187 = vld [vmem:[#allocation5 + $0x308] sm:$0xff]
    %v188 = vld [vmem:[#allocation5 + $0x320] sm:$0xff]
    %v189 = vld [vmem:[#allocation5 + $0x328] sm:$0xff]
    %v190 = vld [vmem:[#allocation5 + $0x340] sm:$0xff]
    %v191 = vld [vmem:[#allocation5 + $0x348] sm:$0xff]
    %v192 = vld [vmem:[#allocation5 + $0x360] sm:$0xff]
    %v193 = vld [vmem:[#allocation5 + $0x368] sm:$0xff]
    %v194 = vld [vmem:[#allocation5 + $0x380] sm:$0xff]
    %v195 = vld [vmem:[#allocation5 + $0x388] sm:$0xff]
    %v196 = vld [vmem:[#allocation5 + $0x3a0] sm:$0xff]
    %v197 = vld [vmem:[#allocation5 + $0x3a8] sm:$0xff]
    %v198 = vld [vmem:[#allocation5 + $0x3c0] sm:$0xff]
    %v199 = vld [vmem:[#allocation5 + $0x3c8] sm:$0xff]
    %v200 = vld [vmem:[#allocation5 + $0x3e0] sm:$0xff]
    %v201 = vld [vmem:[#allocation5 + $0x3e8] sm:$0xff]
    %s202 = scalar_lea.vmem [#allocation7], 1
    %v203 = vld [vmem:[%s202] ss:$8 sm:$0x3]
    %v205 = vlaneseq
    %v206 = vshrl.u32 %v205, 7
    %v207 = vsub.s32 0, %v206
    %v208 = vrot.slane %v203, %v207
    %v209 = vlaneseq
    %v210 = vshrl.u32 %v209, 7
    %v211 = vsub.s32 1, %v210
    %v212 = vrot.slane %v203, %v211
    %215 = vmatprep.subr.mxu0 %v171
    %216 = vmatpush1.msra.mxu0 %v170
    %217 = vmatprep.subr.mxu0 %v173
    %218 = vmatpush1.msra.mxu0 %v172
    %219 = vmatprep.subr.mxu0 %v175
    %220 = vmatpush1.msra.mxu0 %v174
    %221 = vmatprep.subr.mxu0 %v177
    %222 = vmatpush1.msra.mxu0 %v176
    %223 = vmatprep.subr.mxu0 %v179
    %224 = vmatpush1.msra.mxu0 %v178
    %225 = vmatprep.subr.mxu0 %v181
    %226 = vmatpush1.msra.mxu0 %v180
    %227 = vmatprep.subr.mxu0 %v183
    %228 = vmatpush1.msra.mxu0 %v182
    %229 = vmatprep.subr.mxu0 %v185
    %230 = vmatpush1.msra.mxu0 %v184
    %231 = vmatprep.subr.mxu0 %v187
    %232 = vmatpush1.msra.mxu0 %v186
    %233 = vmatprep.subr.mxu0 %v189
    %234 = vmatpush1.msra.mxu0 %v188
    %235 = vmatprep.subr.mxu0 %v191
    %236 = vmatpush1.msra.mxu0 %v190
    %237 = vmatprep.subr.mxu0 %v193
    %238 = vmatpush1.msra.mxu0 %v192
    %239 = vmatprep.subr.mxu0 %v195
    %240 = vmatpush1.msra.mxu0 %v194
    %241 = vmatprep.subr.mxu0 %v197
    %242 = vmatpush1.msra.mxu0 %v196
    %243 = vmatprep.subr.mxu0 %v199
    %244 = vmatpush1.msra.mxu0 %v198
    %245 = vmatprep.subr.mxu0 %v201
    %246 = vmatpush1.msra.mxu0 %v200
    %247 = vmatprep.subr.mxu0 0.0
    %248 = vmatpush1.msra.mxu0 0.0
    %249 = vmatprep.subr.mxu0 0.0
    %250 = vmatpush1.msra.mxu0 0.0
    %251 = vmatprep.subr.mxu0 0.0
    %252 = vmatpush1.msra.mxu0 0.0
    %253 = vmatprep.subr.mxu0 0.0
    %254 = vmatpush1.msra.mxu0 0.0
    %255 = vmatprep.subr.mxu0 0.0
    %256 = vmatpush1.msra.mxu0 0.0
    %257 = vmatprep.subr.mxu0 0.0
    %258 = vmatpush1.msra.mxu0 0.0
    %259 = vmatprep.subr.mxu0 0.0
    %260 = vmatpush1.msra.mxu0 0.0
    %261 = vmatprep.subr.mxu0 0.0
    %262 = vmatpush1.msra.mxu0 0.0
    %263 = vmatprep.subr.mxu0 0.0
    %264 = vmatpush1.msra.mxu0 0.0
    %265 = vmatprep.subr.mxu0 0.0
    %266 = vmatpush1.msra.mxu0 0.0
    %267 = vmatprep.subr.mxu0 0.0
    %268 = vmatpush1.msra.mxu0 0.0
    %269 = vmatprep.subr.mxu0 0.0
    %270 = vmatpush1.msra.mxu0 0.0
    %271 = vmatprep.subr.mxu0 0.0
    %272 = vmatpush1.msra.mxu0 0.0
    %273 = vmatprep.subr.mxu0 0.0
    %274 = vmatpush1.msra.mxu0 0.0
    %275 = vmatprep.subr.mxu0 0.0
    %276 = vmatpush1.msra.mxu0 0.0
    %277 = vmatprep.subr.mxu0 0.0
    %278 = vmatpush1.msra.mxu0 0.0
    %279 = vmatprep.mubr.f32.mxu0 0.0
    %280 = vmatmul.mubr.f32.gmra.mrb[0].mxu0 %v169
    %v281 = vpop.f32.mrb[0].mxu0
    %v282 = vadd.f32 %v208, %v281
    %v283 = vpop.f32.mrb[0].mxu0
    %v284 = vadd.f32 %v212, %v283
    %285 = vdwg.mxu0
    %s286 = scalar_lea.vmem [#allocation7], 33
    %v287 = vld [vmem:[%s286] ss:$8 sm:$0x3]
    %s288 = scalar_lea.vmem [#allocation7], 65
    %v289 = vld [vmem:[%s288] ss:$8 sm:$0x3]
    %v290 = vsel %vm144, %v282, 0.0
    %v291 = vrot.slane %v290, 4
    %v292 = vadd.f32 %v290, %v291
    %v293 = vrot.slane %v292, 2
    %v294 = vadd.f32 %v292, %v293
    %v295 = vrot.slane %v294, 1
    %v296 = vadd.f32 %v294, %v295
    %v297 = vsel %vm144, %v284, 0.0
    %v298 = vrot.slane %v297, 4
    %v299 = vadd.f32 %v297, %v298
    %v300 = vrot.slane %v299, 2
    %v301 = vadd.f32 %v299, %v300
    %v302 = vrot.slane %v301, 1
    %v303 = vadd.f32 %v301, %v302
    %v304 = vmul.f32 %v296, %v152
    %v305 = vmul.f32 %v303, %v152
    %v306 = vsub.f32 %v282, %v304
    %v307 = vsub.f32 %v284, %v305
    %v308 = vmul.f32 %v306, %v306
    %v309 = vmul.f32 %v307, %v307
    %v310 = vsel %vm144, %v308, 0.0
    %v311 = vrot.slane %v310, 4
    %v312 = vadd.f32 %v310, %v311
    %v313 = vrot.slane %v312, 2
    %v314 = vadd.f32 %v312, %v313
    %v315 = vrot.slane %v314, 1
    %v316 = vadd.f32 %v314, %v315
    %v317 = vsel %vm144, %v309, 0.0
    %v318 = vrot.slane %v317, 4
    %v319 = vadd.f32 %v317, %v318
    %v320 = vrot.slane %v319, 2
    %v321 = vadd.f32 %v319, %v320
    %v322 = vrot.slane %v321, 1
    %v323 = vadd.f32 %v321, %v322
    %v324 = vmul.f32 %v316, %v152
    %v325 = vmul.f32 %v323, %v152
    %v326 = vadd.f32 %v324, 1e-05
    %v327 = vadd.f32 %v325, 1e-05
    %v328 = vrsqrt.pop %v326
    %v329 = vrsqrt.pop %v327
    %v332 = vcombine.low %v328, %v329
    %v334 = vunpack.c.l.s4 1966171168
    %v335 = vunpack.c.0.s8 %v334
    %v336 = vlaneseq
    %v337 = vshrl.u32 %v336, 7
    %v338 = vsub.s32 %v335, %v337
    %v339 = vrot.slane %v332, %v338
    %v341 = vunpack.c.l.s4 1966171168
    %v342 = vunpack.c.0.s8 %v341
    %v343 = vlaneseq
    %v344 = vshrl.u32 %v343, 7
    %v345 = vsub.s32 %v342, %v344
    %v346 = vrot.slane %v339, %v345
    %v348 = vmul.f32 %v287, %v346
    %v350 = vlaneseq
    %v351 = vshrl.u32 %v350, 7
    %v352 = vsub.s32 0, %v351
    %v353 = vrot.slane %v348, %v352
    %v354 = vlaneseq
    %v355 = vshrl.u32 %v354, 7
    %v356 = vsub.s32 1, %v355
    %v357 = vrot.slane %v348, %v356
    %v360 = vmul.f32 %v306, %v353
    %v361 = vmul.f32 %v307, %v357
    %v363 = vlaneseq
    %v364 = vshrl.u32 %v363, 7
    %v365 = vsub.s32 0, %v364
    %v366 = vrot.slane %v289, %v365
    %v367 = vlaneseq
    %v368 = vshrl.u32 %v367, 7
    %v369 = vsub.s32 1, %v368
    %v370 = vrot.slane %v289, %v369
    %v373 = vadd.f32 %v360, %v366
    %v374 = vadd.f32 %v361, %v370
    %v375 = vmax.f32 %v373, 0.0
    %v376 = vmax.f32 %v374, 0.0
    %v377 = vld [vmem:[#allocation5 + $0x400] sm:$0xff]
    %v378 = vld [vmem:[#allocation5 + $0x408] sm:$0xff]
    %v379 = vld [vmem:[#allocation5 + $0x410] sm:$0xff]
    %v380 = vld [vmem:[#allocation5 + $0x418] sm:$0xff]
    %v381 = vld [vmem:[#allocation5 + $0x420] sm:$0xff]
    %v382 = vld [vmem:[#allocation5 + $0x428] sm:$0xff]
    %v383 = vld [vmem:[#allocation5 + $0x430] sm:$0xff]
    %v384 = vld [vmem:[#allocation5 + $0x438] sm:$0xff]
    %v385 = vld [vmem:[#allocation5 + $0x440] sm:$0xff]
    %v386 = vld [vmem:[#allocation5 + $0x448] sm:$0xff]
    %v387 = vld [vmem:[#allocation5 + $0x450] sm:$0xff]
    %v388 = vld [vmem:[#allocation5 + $0x458] sm:$0xff]
    %v389 = vld [vmem:[#allocation5 + $0x460] sm:$0xff]
    %v390 = vld [vmem:[#allocation5 + $0x468] sm:$0xff]
    %v391 = vld [vmem:[#allocation5 + $0x470] sm:$0xff]
    %v392 = vld [vmem:[#allocation5 + $0x478] sm:$0xff]
    %v393 = vld [vmem:[#allocation5 + $0x480] sm:$0xff]
    %v394 = vld [vmem:[#allocation5 + $0x488] sm:$0xff]
    %v395 = vld [vmem:[#allocation5 + $0x490] sm:$0xff]
    %v396 = vld [vmem:[#allocation5 + $0x498] sm:$0xff]
    %v397 = vld [vmem:[#allocation5 + $0x4a0] sm:$0xff]
    %v398 = vld [vmem:[#allocation5 + $0x4a8] sm:$0xff]
    %v399 = vld [vmem:[#allocation5 + $0x4b0] sm:$0xff]
    %v400 = vld [vmem:[#allocation5 + $0x4b8] sm:$0xff]
    %v401 = vld [vmem:[#allocation5 + $0x4c0] sm:$0xff]
    %v402 = vld [vmem:[#allocation5 + $0x4c8] sm:$0xff]
    %v403 = vld [vmem:[#allocation5 + $0x4d0] sm:$0xff]
    %v404 = vld [vmem:[#allocation5 + $0x4d8] sm:$0xff]
    %v405 = vld [vmem:[#allocation5 + $0x4e0] sm:$0xff]
    %v406 = vld [vmem:[#allocation5 + $0x4e8] sm:$0xff]
    %v407 = vld [vmem:[#allocation5 + $0x4f0] sm:$0xff]
    %v408 = vld [vmem:[#allocation5 + $0x4f8] sm:$0xff]
    %v409 = vld [vmem:[#allocation5 + $0x500] sm:$0xff]
    %v410 = vld [vmem:[#allocation5 + $0x508] sm:$0xff]
    %v411 = vld [vmem:[#allocation5 + $0x510] sm:$0xff]
    %v412 = vld [vmem:[#allocation5 + $0x518] sm:$0xff]
    %v413 = vld [vmem:[#allocation5 + $0x520] sm:$0xff]
    %v414 = vld [vmem:[#allocation5 + $0x528] sm:$0xff]
    %v415 = vld [vmem:[#allocation5 + $0x530] sm:$0xff]
    %v416 = vld [vmem:[#allocation5 + $0x538] sm:$0xff]
    %v417 = vld [vmem:[#allocation5 + $0x540] sm:$0xff]
    %v418 = vld [vmem:[#allocation5 + $0x548] sm:$0xff]
    %v419 = vld [vmem:[#allocation5 + $0x550] sm:$0xff]
    %v420 = vld [vmem:[#allocation5 + $0x558] sm:$0xff]
    %v421 = vld [vmem:[#allocation5 + $0x560] sm:$0xff]
    %v422 = vld [vmem:[#allocation5 + $0x568] sm:$0xff]
    %v423 = vld [vmem:[#allocation5 + $0x570] sm:$0xff]
    %v424 = vld [vmem:[#allocation5 + $0x578] sm:$0xff]
    %v425 = vld [vmem:[#allocation5 + $0x580] sm:$0xff]
    %v426 = vld [vmem:[#allocation5 + $0x588] sm:$0xff]
    %v427 = vld [vmem:[#allocation5 + $0x590] sm:$0xff]
    %v428 = vld [vmem:[#allocation5 + $0x598] sm:$0xff]
    %v429 = vld [vmem:[#allocation5 + $0x5a0] sm:$0xff]
    %v430 = vld [vmem:[#allocation5 + $0x5a8] sm:$0xff]
    %v431 = vld [vmem:[#allocation5 + $0x5b0] sm:$0xff]
    %v432 = vld [vmem:[#allocation5 + $0x5b8] sm:$0xff]
    %v433 = vld [vmem:[#allocation5 + $0x5c0] sm:$0xff]
    %v434 = vld [vmem:[#allocation5 + $0x5c8] sm:$0xff]
    %v435 = vld [vmem:[#allocation5 + $0x5d0] sm:$0xff]
    %v436 = vld [vmem:[#allocation5 + $0x5d8] sm:$0xff]
    %v437 = vld [vmem:[#allocation5 + $0x5e0] sm:$0xff]
    %v438 = vld [vmem:[#allocation5 + $0x5e8] sm:$0xff]
    %v439 = vld [vmem:[#allocation5 + $0x5f0] sm:$0xff]
    %v440 = vld [vmem:[#allocation5 + $0x5f8] sm:$0xff]
    %v441 = vld [vmem:[#allocation5 + $0x600] sm:$0xff]
    %v442 = vld [vmem:[#allocation5 + $0x608] sm:$0xff]
    %v443 = vld [vmem:[#allocation5 + $0x610] sm:$0xff]
    %v444 = vld [vmem:[#allocation5 + $0x618] sm:$0xff]
    %v445 = vld [vmem:[#allocation5 + $0x620] sm:$0xff]
    %v446 = vld [vmem:[#allocation5 + $0x628] sm:$0xff]
    %v447 = vld [vmem:[#allocation5 + $0x630] sm:$0xff]
    %v448 = vld [vmem:[#allocation5 + $0x638] sm:$0xff]
    %v449 = vld [vmem:[#allocation5 + $0x640] sm:$0xff]
    %v450 = vld [vmem:[#allocation5 + $0x648] sm:$0xff]
    %v451 = vld [vmem:[#allocation5 + $0x650] sm:$0xff]
    %v452 = vld [vmem:[#allocation5 + $0x658] sm:$0xff]
    %v453 = vld [vmem:[#allocation5 + $0x660] sm:$0xff]
    %v454 = vld [vmem:[#allocation5 + $0x668] sm:$0xff]
    %v455 = vld [vmem:[#allocation5 + $0x670] sm:$0xff]
    %v456 = vld [vmem:[#allocation5 + $0x678] sm:$0xff]
    %v457 = vld [vmem:[#allocation5 + $0x680] sm:$0xff]
    %v458 = vld [vmem:[#allocation5 + $0x688] sm:$0xff]
    %v459 = vld [vmem:[#allocation5 + $0x690] sm:$0xff]
    %v460 = vld [vmem:[#allocation5 + $0x698] sm:$0xff]
    %v461 = vld [vmem:[#allocation5 + $0x6a0] sm:$0xff]
    %v462 = vld [vmem:[#allocation5 + $0x6a8] sm:$0xff]
    %v463 = vld [vmem:[#allocation5 + $0x6b0] sm:$0xff]
    %v464 = vld [vmem:[#allocation5 + $0x6b8] sm:$0xff]
    %v465 = vld [vmem:[#allocation5 + $0x6c0] sm:$0xff]
    %v466 = vld [vmem:[#allocation5 + $0x6c8] sm:$0xff]
    %v467 = vld [vmem:[#allocation5 + $0x6d0] sm:$0xff]
    %v468 = vld [vmem:[#allocation5 + $0x6d8] sm:$0xff]
    %v469 = vld [vmem:[#allocation5 + $0x6e0] sm:$0xff]
    %v470 = vld [vmem:[#allocation5 + $0x6e8] sm:$0xff]
    %v471 = vld [vmem:[#allocation5 + $0x6f0] sm:$0xff]
    %v472 = vld [vmem:[#allocation5 + $0x6f8] sm:$0xff]
    %v473 = vld [vmem:[#allocation5 + $0x700] sm:$0xff]
    %v474 = vld [vmem:[#allocation5 + $0x708] sm:$0xff]
    %v475 = vld [vmem:[#allocation5 + $0x710] sm:$0xff]
    %v476 = vld [vmem:[#allocation5 + $0x718] sm:$0xff]
    %v477 = vld [vmem:[#allocation5 + $0x720] sm:$0xff]
    %v478 = vld [vmem:[#allocation5 + $0x728] sm:$0xff]
    %v479 = vld [vmem:[#allocation5 + $0x730] sm:$0xff]
    %v480 = vld [vmem:[#allocation5 + $0x738] sm:$0xff]
    %v481 = vld [vmem:[#allocation5 + $0x740] sm:$0xff]
    %v482 = vld [vmem:[#allocation5 + $0x748] sm:$0xff]
    %v483 = vld [vmem:[#allocation5 + $0x750] sm:$0xff]
    %v484 = vld [vmem:[#allocation5 + $0x758] sm:$0xff]
    %v485 = vld [vmem:[#allocation5 + $0x760] sm:$0xff]
    %v486 = vld [vmem:[#allocation5 + $0x768] sm:$0xff]
    %v487 = vld [vmem:[#allocation5 + $0x770] sm:$0xff]
    %v488 = vld [vmem:[#allocation5 + $0x778] sm:$0xff]
    %v489 = vld [vmem:[#allocation5 + $0x780] sm:$0xff]
    %v490 = vld [vmem:[#allocation5 + $0x788] sm:$0xff]
    %v491 = vld [vmem:[#allocation5 + $0x790] sm:$0xff]
    %v492 = vld [vmem:[#allocation5 + $0x798] sm:$0xff]
    %v493 = vld [vmem:[#allocation5 + $0x7a0] sm:$0xff]
    %v494 = vld [vmem:[#allocation5 + $0x7a8] sm:$0xff]
    %v495 = vld [vmem:[#allocation5 + $0x7b0] sm:$0xff]
    %v496 = vld [vmem:[#allocation5 + $0x7b8] sm:$0xff]
    %v497 = vld [vmem:[#allocation5 + $0x7c0] sm:$0xff]
    %v498 = vld [vmem:[#allocation5 + $0x7c8] sm:$0xff]
    %v499 = vld [vmem:[#allocation5 + $0x7d0] sm:$0xff]
    %v500 = vld [vmem:[#allocation5 + $0x7d8] sm:$0xff]
    %v501 = vld [vmem:[#allocation5 + $0x7e0] sm:$0xff]
    %v502 = vld [vmem:[#allocation5 + $0x7e8] sm:$0xff]
    %v503 = vld [vmem:[#allocation5 + $0x7f0] sm:$0xff]
    %v504 = vld [vmem:[#allocation5 + $0x7f8] sm:$0xff]
    %s505 = scalar_lea.vmem [#allocation7], 2
    %v506 = vld [vmem:[%s505] ss:$8 sm:$0xf]
    %v508 = vlaneseq
    %v509 = vshrl.u32 %v508, 7
    %v510 = vsub.s32 0, %v509
    %v511 = vrot.slane %v506, %v510
    %v512 = vlaneseq
    %v513 = vshrl.u32 %v512, 7
    %v514 = vsub.s32 1, %v513
    %v515 = vrot.slane %v506, %v514
    %v516 = vlaneseq
    %v517 = vshrl.u32 %v516, 7
    %v518 = vsub.s32 2, %v517
    %v519 = vrot.slane %v506, %v518
    %v520 = vlaneseq
    %v521 = vshrl.u32 %v520, 7
    %v522 = vsub.s32 3, %v521
    %v523 = vrot.slane %v506, %v522
    %528 = vmatprep.subr.mxu0 %v378
    %529 = vmatpush1.msra.mxu0 %v377
    %530 = vmatprep.subr.mxu0 %v382
    %531 = vmatpush1.msra.mxu0 %v381
    %532 = vmatprep.subr.mxu0 %v386
    %533 = vmatpush1.msra.mxu0 %v385
    %534 = vmatprep.subr.mxu0 %v390
    %535 = vmatpush1.msra.mxu0 %v389
    %536 = vmatprep.subr.mxu0 %v394
    %537 = vmatpush1.msra.mxu0 %v393
    %538 = vmatprep.subr.mxu0 %v398
    %539 = vmatpush1.msra.mxu0 %v397
    %540 = vmatprep.subr.mxu0 %v402
    %541 = vmatpush1.msra.mxu0 %v401
    %542 = vmatprep.subr.mxu0 %v406
    %543 = vmatpush1.msra.mxu0 %v405
    %544 = vmatprep.subr.mxu0 %v410
    %545 = vmatpush1.msra.mxu0 %v409
    %546 = vmatprep.subr.mxu0 %v414
    %547 = vmatpush1.msra.mxu0 %v413
    %548 = vmatprep.subr.mxu0 %v418
    %549 = vmatpush1.msra.mxu0 %v417
    %550 = vmatprep.subr.mxu0 %v422
    %551 = vmatpush1.msra.mxu0 %v421
    %552 = vmatprep.subr.mxu0 %v426
    %553 = vmatpush1.msra.mxu0 %v425
    %554 = vmatprep.subr.mxu0 %v430
    %555 = vmatpush1.msra.mxu0 %v429
    %556 = vmatprep.subr.mxu0 %v434
    %557 = vmatpush1.msra.mxu0 %v433
    %558 = vmatprep.subr.mxu0 %v438
    %559 = vmatpush1.msra.mxu0 %v437
    %560 = vmatprep.subr.mxu0 %v442
    %561 = vmatpush1.msra.mxu0 %v441
    %562 = vmatprep.subr.mxu0 %v446
    %563 = vmatpush1.msra.mxu0 %v445
    %564 = vmatprep.subr.mxu0 %v450
    %565 = vmatpush1.msra.mxu0 %v449
    %566 = vmatprep.subr.mxu0 %v454
    %567 = vmatpush1.msra.mxu0 %v453
    %568 = vmatprep.subr.mxu0 %v458
    %569 = vmatpush1.msra.mxu0 %v457
    %570 = vmatprep.subr.mxu0 %v462
    %571 = vmatpush1.msra.mxu0 %v461
    %572 = vmatprep.subr.mxu0 %v466
    %573 = vmatpush1.msra.mxu0 %v465
    %574 = vmatprep.subr.mxu0 %v470
    %575 = vmatpush1.msra.mxu0 %v469
    %576 = vmatprep.subr.mxu0 %v474
    %577 = vmatpush1.msra.mxu0 %v473
    %578 = vmatprep.subr.mxu0 %v478
    %579 = vmatpush1.msra.mxu0 %v477
    %580 = vmatprep.subr.mxu0 %v482
    %581 = vmatpush1.msra.mxu0 %v481
    %582 = vmatprep.subr.mxu0 %v486
    %583 = vmatpush1.msra.mxu0 %v485
    %584 = vmatprep.subr.mxu0 %v490
    %585 = vmatpush1.msra.mxu0 %v489
    %586 = vmatprep.subr.mxu0 %v494
    %587 = vmatpush1.msra.mxu0 %v493
    %588 = vmatprep.subr.mxu0 %v498
    %589 = vmatpush1.msra.mxu0 %v497
    %590 = vmatprep.subr.mxu0 %v502
    %591 = vmatpush1.msra.mxu0 %v501
    %592 = vmatprep.mubr.f32.mxu0 %v376
    %593 = vmatmul.mubr.f32.gmra.mrb[0].mxu0 %v375
    %v594 = vpop.f32.mrb[0].mxu0
    %v595 = vadd.f32 %v511, %v594
    %v596 = vpop.f32.mrb[0].mxu0
    %v597 = vadd.f32 %v515, %v596
    %598 = vdwg.mxu0
    %599 = vmatprep.subr.mxu0 %v380
    %600 = vmatpush1.msra.mxu0 %v379
    %601 = vmatprep.subr.mxu0 %v384
    %602 = vmatpush1.msra.mxu0 %v383
    %603 = vmatprep.subr.mxu0 %v388
    %604 = vmatpush1.msra.mxu0 %v387
    %605 = vmatprep.subr.mxu0 %v392
    %606 = vmatpush1.msra.mxu0 %v391
    %607 = vmatprep.subr.mxu0 %v396
    %608 = vmatpush1.msra.mxu0 %v395
    %609 = vmatprep.subr.mxu0 %v400
    %610 = vmatpush1.msra.mxu0 %v399
    %611 = vmatprep.subr.mxu0 %v404
    %612 = vmatpush1.msra.mxu0 %v403
    %613 = vmatprep.subr.mxu0 %v408
    %614 = vmatpush1.msra.mxu0 %v407
    %615 = vmatprep.subr.mxu0 %v412
    %616 = vmatpush1.msra.mxu0 %v411
    %617 = vmatprep.subr.mxu0 %v416
    %618 = vmatpush1.msra.mxu0 %v415
    %619 = vmatprep.subr.mxu0 %v420
    %620 = vmatpush1.msra.mxu0 %v419
    %621 = vmatprep.subr.mxu0 %v424
    %622 = vmatpush1.msra.mxu0 %v423
    %623 = vmatprep.subr.mxu0 %v428
    %624 = vmatpush1.msra.mxu0 %v427
    %625 = vmatprep.subr.mxu0 %v432
    %626 = vmatpush1.msra.mxu0 %v431
    %627 = vmatprep.subr.mxu0 %v436
    %628 = vmatpush1.msra.mxu0 %v435
    %629 = vmatprep.subr.mxu0 %v440
    %630 = vmatpush1.msra.mxu0 %v439
    %631 = vmatprep.subr.mxu0 %v444
    %632 = vmatpush1.msra.mxu0 %v443
    %633 = vmatprep.subr.mxu0 %v448
    %634 = vmatpush1.msra.mxu0 %v447
    %635 = vmatprep.subr.mxu0 %v452
    %636 = vmatpush1.msra.mxu0 %v451
    %637 = vmatprep.subr.mxu0 %v456
    %638 = vmatpush1.msra.mxu0 %v455
    %639 = vmatprep.subr.mxu0 %v460
    %640 = vmatpush1.msra.mxu0 %v459
    %641 = vmatprep.subr.mxu0 %v464
    %642 = vmatpush1.msra.mxu0 %v463
    %643 = vmatprep.subr.mxu0 %v468
    %644 = vmatpush1.msra.mxu0 %v467
    %645 = vmatprep.subr.mxu0 %v472
    %646 = vmatpush1.msra.mxu0 %v471
    %647 = vmatprep.subr.mxu0 %v476
    %648 = vmatpush1.msra.mxu0 %v475
    %649 = vmatprep.subr.mxu0 %v480
    %650 = vmatpush1.msra.mxu0 %v479
    %651 = vmatprep.subr.mxu0 %v484
    %652 = vmatpush1.msra.mxu0 %v483
    %653 = vmatprep.subr.mxu0 %v488
    %654 = vmatpush1.msra.mxu0 %v487
    %655 = vmatprep.subr.mxu0 %v492
    %656 = vmatpush1.msra.mxu0 %v491
    %657 = vmatprep.subr.mxu0 %v496
    %658 = vmatpush1.msra.mxu0 %v495
    %659 = vmatprep.subr.mxu0 %v500
    %660 = vmatpush1.msra.mxu0 %v499
    %661 = vmatprep.subr.mxu0 %v504
    %662 = vmatpush1.msra.mxu0 %v503
    %663 = vmatprep.mubr.f32.mxu0 %v376
    %664 = vmatmul.mubr.f32.gmra.mrb[0].mxu0 %v375
    %v665 = vpop.f32.mrb[0].mxu0
    %v666 = vadd.f32 %v519, %v665
    %v667 = vpop.f32.mrb[0].mxu0
    %v668 = vadd.f32 %v523, %v667
    %669 = vdwg.mxu0
    %s670 = scalar_lea.vmem [#allocation7], 34
    %v671 = vld [vmem:[%s670] ss:$8 sm:$0xf]
    %s672 = scalar_lea.vmem [#allocation7], 66
    %v673 = vld [vmem:[%s672] ss:$8 sm:$0xf]
    %v674 = vsel %vm144, %v595, 0.0
    %v675 = vrot.slane %v674, 4
    %v676 = vadd.f32 %v674, %v675
    %v677 = vrot.slane %v676, 2
    %v678 = vadd.f32 %v676, %v677
    %v679 = vrot.slane %v678, 1
    %v680 = vadd.f32 %v678, %v679
    %v681 = vsel %vm144, %v597, 0.0
    %v682 = vrot.slane %v681, 4
    %v683 = vadd.f32 %v681, %v682
    %v684 = vrot.slane %v683, 2
    %v685 = vadd.f32 %v683, %v684
    %v686 = vrot.slane %v685, 1
    %v687 = vadd.f32 %v685, %v686
    %v688 = vsel %vm144, %v666, 0.0
    %v689 = vrot.slane %v688, 4
    %v690 = vadd.f32 %v688, %v689
    %v691 = vrot.slane %v690, 2
    %v692 = vadd.f32 %v690, %v691
    %v693 = vrot.slane %v692, 1
    %v694 = vadd.f32 %v692, %v693
    %v695 = vsel %vm144, %v668, 0.0
    %v696 = vrot.slane %v695, 4
    %v697 = vadd.f32 %v695, %v696
    %v698 = vrot.slane %v697, 2
    %v699 = vadd.f32 %v697, %v698
    %v700 = vrot.slane %v699, 1
    %v701 = vadd.f32 %v699, %v700
    %v702 = vmul.f32 %v680, %v152
    %v703 = vmul.f32 %v687, %v152
    %v704 = vmul.f32 %v694, %v152
    %v705 = vmul.f32 %v701, %v152
    %v706 = vsub.f32 %v595, %v702
    %v707 = vsub.f32 %v597, %v703
    %v708 = vsub.f32 %v666, %v704
    %v709 = vsub.f32 %v668, %v705
    %v710 = vmul.f32 %v706, %v706
    %v711 = vmul.f32 %v707, %v707
    %v712 = vmul.f32 %v708, %v708
    %v713 = vmul.f32 %v709, %v709
    %v714 = vsel %vm144, %v710, 0.0
    %v715 = vrot.slane %v714, 4
    %v716 = vadd.f32 %v714, %v715
    %v717 = vrot.slane %v716, 2
    %v718 = vadd.f32 %v716, %v717
    %v719 = vrot.slane %v718, 1
    %v720 = vadd.f32 %v718, %v719
    %v721 = vsel %vm144, %v711, 0.0
    %v722 = vrot.slane %v721, 4
    %v723 = vadd.f32 %v721, %v722
    %v724 = vrot.slane %v723, 2
    %v725 = vadd.f32 %v723, %v724
    %v726 = vrot.slane %v725, 1
    %v727 = vadd.f32 %v725, %v726
    %v728 = vsel %vm144, %v712, 0.0
    %v729 = vrot.slane %v728, 4
    %v730 = vadd.f32 %v728, %v729
    %v731 = vrot.slane %v730, 2
    %v732 = vadd.f32 %v730, %v731
    %v733 = vrot.slane %v732, 1
    %v734 = vadd.f32 %v732, %v733
    %v735 = vsel %vm144, %v713, 0.0
    %v736 = vrot.slane %v735, 4
    %v737 = vadd.f32 %v735, %v736
    %v738 = vrot.slane %v737, 2
    %v739 = vadd.f32 %v737, %v738
    %v740 = vrot.slane %v739, 1
    %v741 = vadd.f32 %v739, %v740
    %v742 = vmul.f32 %v720, %v152
    %v743 = vmul.f32 %v727, %v152
    %v744 = vmul.f32 %v734, %v152
    %v745 = vmul.f32 %v741, %v152
    %v746 = vadd.f32 %v742, 1e-05
    %v747 = vadd.f32 %v743, 1e-05
    %v748 = vadd.f32 %v744, 1e-05
    %v749 = vadd.f32 %v745, 1e-05
    %v750 = vrsqrt.pop %v746
    %v751 = vrsqrt.pop %v747
    %v752 = vrsqrt.pop %v748
    %v753 = vrsqrt.pop %v749
    %v758 = vcombine.low %v750, %v751
    %v759 = vcombine.low %v752, %v753
    %v761 = vunpack.c.l.s4 1966171168
    %v762 = vunpack.c.0.s8 %v761
    %v763 = vlaneseq
    %v764 = vshrl.u32 %v763, 7
    %v765 = vsub.s32 %v762, %v764
    %v766 = vrot.slane %v758, %v765
    %v768 = vunpack.c.l.s4 1966171168
    %v769 = vunpack.c.0.s8 %v768
    %v770 = vlaneseq
    %v771 = vshrl.u32 %v770, 7
    %v772 = vsub.s32 %v769, %v771
    %v773 = vrot.slane %v759, %v772
    %v774 = vcombine.low %v766, %v773
    %v776 = vunpack.c.l.s4 1966171168
    %v777 = vunpack.c.0.s8 %v776
    %v778 = vlaneseq
    %v779 = vshrl.u32 %v778, 7
    %v780 = vsub.s32 %v777, %v779
    %v781 = vrot.slane %v774, %v780
    %v783 = vmul.f32 %v671, %v781
    %v785 = vlaneseq
    %v786 = vshrl.u32 %v785, 7
    %v787 = vsub.s32 0, %v786
    %v788 = vrot.slane %v783, %v787
    %v789 = vlaneseq
    %v790 = vshrl.u32 %v789, 7
    %v791 = vsub.s32 1, %v790
    %v792 = vrot.slane %v783, %v791
    %v793 = vlaneseq
    %v794 = vshrl.u32 %v793, 7
    %v795 = vsub.s32 2, %v794
    %v796 = vrot.slane %v783, %v795
    %v797 = vlaneseq
    %v798 = vshrl.u32 %v797, 7
    %v799 = vsub.s32 3, %v798
    %v800 = vrot.slane %v783, %v799
    %v805 = vmul.f32 %v706, %v788
    %v806 = vmul.f32 %v707, %v792
    %v807 = vmul.f32 %v708, %v796
    %v808 = vmul.f32 %v709, %v800
    %v810 = vlaneseq
    %v811 = vshrl.u32 %v810, 7
    %v812 = vsub.s32 0, %v811
    %v813 = vrot.slane %v673, %v812
    %v814 = vlaneseq
    %v815 = vshrl.u32 %v814, 7
    %v816 = vsub.s32 1, %v815
    %v817 = vrot.slane %v673, %v816
    %v818 = vlaneseq
    %v819 = vshrl.u32 %v818, 7
    %v820 = vsub.s32 2, %v819
    %v821 = vrot.slane %v673, %v820
    %v822 = vlaneseq
    %v823 = vshrl.u32 %v822, 7
    %v824 = vsub.s32 3, %v823
    %v825 = vrot.slane %v673, %v824
    %v830 = vadd.f32 %v805, %v813
    %v831 = vadd.f32 %v806, %v817
    %v832 = vadd.f32 %v807, %v821
    %v833 = vadd.f32 %v808, %v825
    %v834 = vmax.f32 %v830, 0.0
    %v835 = vmax.f32 %v831, 0.0
    %v836 = vmax.f32 %v832, 0.0
    %v837 = vmax.f32 %v833, 0.0
    %v838 = vld [vmem:[#allocation5 + $0x800] sm:$0xff]
    %v839 = vld [vmem:[#allocation5 + $0x808] sm:$0xff]
    %v840 = vld [vmem:[#allocation5 + $0x820] sm:$0xff]
    %v841 = vld [vmem:[#allocation5 + $0x828] sm:$0xff]
    %v842 = vld [vmem:[#allocation5 + $0x840] sm:$0xff]
    %v843 = vld [vmem:[#allocation5 + $0x848] sm:$0xff]
    %v844 = vld [vmem:[#allocation5 + $0x860] sm:$0xff]
    %v845 = vld [vmem:[#allocation5 + $0x868] sm:$0xff]
    %v846 = vld [vmem:[#allocation5 + $0x880] sm:$0xff]
    %v847 = vld [vmem:[#allocation5 + $0x888] sm:$0xff]
    %v848 = vld [vmem:[#allocation5 + $0x8a0] sm:$0xff]
    %v849 = vld [vmem:[#allocation5 + $0x8a8] sm:$0xff]
    %v850 = vld [vmem:[#allocation5 + $0x8c0] sm:$0xff]
    %v851 = vld [vmem:[#allocation5 + $0x8c8] sm:$0xff]
    %v852 = vld [vmem:[#allocation5 + $0x8e0] sm:$0xff]
    %v853 = vld [vmem:[#allocation5 + $0x8e8] sm:$0xff]
    %v854 = vld [vmem:[#allocation5 + $0x900] sm:$0xff]
    %v855 = vld [vmem:[#allocation5 + $0x908] sm:$0xff]
    %v856 = vld [vmem:[#allocation5 + $0x920] sm:$0xff]
    %v857 = vld [vmem:[#allocation5 + $0x928] sm:$0xff]
    %v858 = vld [vmem:[#allocation5 + $0x940] sm:$0xff]
    %v859 = vld [vmem:[#allocation5 + $0x948] sm:$0xff]
    %v860 = vld [vmem:[#allocation5 + $0x960] sm:$0xff]
    %v861 = vld [vmem:[#allocation5 + $0x968] sm:$0xff]
    %v862 = vld [vmem:[#allocation5 + $0x980] sm:$0xff]
    %v863 = vld [vmem:[#allocation5 + $0x988] sm:$0xff]
    %v864 = vld [vmem:[#allocation5 + $0x9a0] sm:$0xff]
    %v865 = vld [vmem:[#allocation5 + $0x9a8] sm:$0xff]
    %v866 = vld [vmem:[#allocation5 + $0x9c0] sm:$0xff]
    %v867 = vld [vmem:[#allocation5 + $0x9c8] sm:$0xff]
    %v868 = vld [vmem:[#allocation5 + $0x9e0] sm:$0xff]
    %v869 = vld [vmem:[#allocation5 + $0x9e8] sm:$0xff]
    %v870 = vld [vmem:[#allocation5 + $0xa00] sm:$0xff]
    %v871 = vld [vmem:[#allocation5 + $0xa08] sm:$0xff]
    %v872 = vld [vmem:[#allocation5 + $0xa20] sm:$0xff]
    %v873 = vld [vmem:[#allocation5 + $0xa28] sm:$0xff]
    %v874 = vld [vmem:[#allocation5 + $0xa40] sm:$0xff]
    %v875 = vld [vmem:[#allocation5 + $0xa48] sm:$0xff]
    %v876 = vld [vmem:[#allocation5 + $0xa60] sm:$0xff]
    %v877 = vld [vmem:[#allocation5 + $0xa68] sm:$0xff]
    %v878 = vld [vmem:[#allocation5 + $0xa80] sm:$0xff]
    %v879 = vld [vmem:[#allocation5 + $0xa88] sm:$0xff]
    %v880 = vld [vmem:[#allocation5 + $0xaa0] sm:$0xff]
    %v881 = vld [vmem:[#allocation5 + $0xaa8] sm:$0xff]
    %v882 = vld [vmem:[#allocation5 + $0xac0] sm:$0xff]
    %v883 = vld [vmem:[#allocation5 + $0xac8] sm:$0xff]
    %v884 = vld [vmem:[#allocation5 + $0xae0] sm:$0xff]
    %v885 = vld [vmem:[#allocation5 + $0xae8] sm:$0xff]
    %v886 = vld [vmem:[#allocation5 + $0xb00] sm:$0xff]
    %v887 = vld [vmem:[#allocation5 + $0xb08] sm:$0xff]
    %v888 = vld [vmem:[#allocation5 + $0xb20] sm:$0xff]
    %v889 = vld [vmem:[#allocation5 + $0xb28] sm:$0xff]
    %v890 = vld [vmem:[#allocation5 + $0xb40] sm:$0xff]
    %v891 = vld [vmem:[#allocation5 + $0xb48] sm:$0xff]
    %v892 = vld [vmem:[#allocation5 + $0xb60] sm:$0xff]
    %v893 = vld [vmem:[#allocation5 + $0xb68] sm:$0xff]
    %v894 = vld [vmem:[#allocation5 + $0xb80] sm:$0xff]
    %v895 = vld [vmem:[#allocation5 + $0xb88] sm:$0xff]
    %v896 = vld [vmem:[#allocation5 + $0xba0] sm:$0xff]
    %v897 = vld [vmem:[#allocation5 + $0xba8] sm:$0xff]
    %v898 = vld [vmem:[#allocation5 + $0xbc0] sm:$0xff]
    %v899 = vld [vmem:[#allocation5 + $0xbc8] sm:$0xff]
    %v900 = vld [vmem:[#allocation5 + $0xbe0] sm:$0xff]
    %v901 = vld [vmem:[#allocation5 + $0xbe8] sm:$0xff]
    %v902 = vld [vmem:[#allocation5 + $0xc00] sm:$0xff]
    %v903 = vld [vmem:[#allocation5 + $0xc08] sm:$0xff]
    %v904 = vld [vmem:[#allocation5 + $0xc20] sm:$0xff]
    %v905 = vld [vmem:[#allocation5 + $0xc28] sm:$0xff]
    %v906 = vld [vmem:[#allocation5 + $0xc40] sm:$0xff]
    %v907 = vld [vmem:[#allocation5 + $0xc48] sm:$0xff]
    %v908 = vld [vmem:[#allocation5 + $0xc60] sm:$0xff]
    %v909 = vld [vmem:[#allocation5 + $0xc68] sm:$0xff]
    %v910 = vld [vmem:[#allocation5 + $0xc80] sm:$0xff]
    %v911 = vld [vmem:[#allocation5 + $0xc88] sm:$0xff]
    %v912 = vld [vmem:[#allocation5 + $0xca0] sm:$0xff]
    %v913 = vld [vmem:[#allocation5 + $0xca8] sm:$0xff]
    %v914 = vld [vmem:[#allocation5 + $0xcc0] sm:$0xff]
    %v915 = vld [vmem:[#allocation5 + $0xcc8] sm:$0xff]
    %v916 = vld [vmem:[#allocation5 + $0xce0] sm:$0xff]
    %v917 = vld [vmem:[#allocation5 + $0xce8] sm:$0xff]
    %v918 = vld [vmem:[#allocation5 + $0xd00] sm:$0xff]
    %v919 = vld [vmem:[#allocation5 + $0xd08] sm:$0xff]
    %v920 = vld [vmem:[#allocation5 + $0xd20] sm:$0xff]
    %v921 = vld [vmem:[#allocation5 + $0xd28] sm:$0xff]
    %v922 = vld [vmem:[#allocation5 + $0xd40] sm:$0xff]
    %v923 = vld [vmem:[#allocation5 + $0xd48] sm:$0xff]
    %v924 = vld [vmem:[#allocation5 + $0xd60] sm:$0xff]
    %v925 = vld [vmem:[#allocation5 + $0xd68] sm:$0xff]
    %v926 = vld [vmem:[#allocation5 + $0xd80] sm:$0xff]
    %v927 = vld [vmem:[#allocation5 + $0xd88] sm:$0xff]
    %v928 = vld [vmem:[#allocation5 + $0xda0] sm:$0xff]
    %v929 = vld [vmem:[#allocation5 + $0xda8] sm:$0xff]
    %v930 = vld [vmem:[#allocation5 + $0xdc0] sm:$0xff]
    %v931 = vld [vmem:[#allocation5 + $0xdc8] sm:$0xff]
    %v932 = vld [vmem:[#allocation5 + $0xde0] sm:$0xff]
    %v933 = vld [vmem:[#allocation5 + $0xde8] sm:$0xff]
    %v934 = vld [vmem:[#allocation5 + $0xe00] sm:$0xff]
    %v935 = vld [vmem:[#allocation5 + $0xe08] sm:$0xff]
    %v936 = vld [vmem:[#allocation5 + $0xe20] sm:$0xff]
    %v937 = vld [vmem:[#allocation5 + $0xe28] sm:$0xff]
    %v938 = vld [vmem:[#allocation5 + $0xe40] sm:$0xff]
    %v939 = vld [vmem:[#allocation5 + $0xe48] sm:$0xff]
    %v940 = vld [vmem:[#allocation5 + $0xe60] sm:$0xff]
    %v941 = vld [vmem:[#allocation5 + $0xe68] sm:$0xff]
    %v942 = vld [vmem:[#allocation5 + $0xe80] sm:$0xff]
    %v943 = vld [vmem:[#allocation5 + $0xe88] sm:$0xff]
    %v944 = vld [vmem:[#allocation5 + $0xea0] sm:$0xff]
    %v945 = vld [vmem:[#allocation5 + $0xea8] sm:$0xff]
    %v946 = vld [vmem:[#allocation5 + $0xec0] sm:$0xff]
    %v947 = vld [vmem:[#allocation5 + $0xec8] sm:$0xff]
    %v948 = vld [vmem:[#allocation5 + $0xee0] sm:$0xff]
    %v949 = vld [vmem:[#allocation5 + $0xee8] sm:$0xff]
    %v950 = vld [vmem:[#allocation5 + $0xf00] sm:$0xff]
    %v951 = vld [vmem:[#allocation5 + $0xf08] sm:$0xff]
    %v952 = vld [vmem:[#allocation5 + $0xf20] sm:$0xff]
    %v953 = vld [vmem:[#allocation5 + $0xf28] sm:$0xff]
    %v954 = vld [vmem:[#allocation5 + $0xf40] sm:$0xff]
    %v955 = vld [vmem:[#allocation5 + $0xf48] sm:$0xff]
    %v956 = vld [vmem:[#allocation5 + $0xf60] sm:$0xff]
    %v957 = vld [vmem:[#allocation5 + $0xf68] sm:$0xff]
    %v958 = vld [vmem:[#allocation5 + $0xf80] sm:$0xff]
    %v959 = vld [vmem:[#allocation5 + $0xf88] sm:$0xff]
    %v960 = vld [vmem:[#allocation5 + $0xfa0] sm:$0xff]
    %v961 = vld [vmem:[#allocation5 + $0xfa8] sm:$0xff]
    %v962 = vld [vmem:[#allocation5 + $0xfc0] sm:$0xff]
    %v963 = vld [vmem:[#allocation5 + $0xfc8] sm:$0xff]
    %v964 = vld [vmem:[#allocation5 + $0xfe0] sm:$0xff]
    %v965 = vld [vmem:[#allocation5 + $0xfe8] sm:$0xff]
    %s966 = scalar_lea.vmem [#allocation7], 3
    %v967 = vld [vmem:[%s966] ss:$8 sm:$0x3]
    %v969 = vlaneseq
    %v970 = vshrl.u32 %v969, 7
    %v971 = vsub.s32 0, %v970
    %v972 = vrot.slane %v967, %v971
    %v973 = vlaneseq
    %v974 = vshrl.u32 %v973, 7
    %v975 = vsub.s32 1, %v974
    %v976 = vrot.slane %v967, %v975
    %979 = vmatprep.subr.mxu0 %v839
    %980 = vmatpush1.msra.mxu0 %v838
    %981 = vmatprep.subr.mxu0 %v841
    %982 = vmatpush1.msra.mxu0 %v840
    %983 = vmatprep.subr.mxu0 %v843
    %984 = vmatpush1.msra.mxu0 %v842
    %985 = vmatprep.subr.mxu0 %v845
    %986 = vmatpush1.msra.mxu0 %v844
    %987 = vmatprep.subr.mxu0 %v847
    %988 = vmatpush1.msra.mxu0 %v846
    %989 = vmatprep.subr.mxu0 %v849
    %990 = vmatpush1.msra.mxu0 %v848
    %991 = vmatprep.subr.mxu0 %v851
    %992 = vmatpush1.msra.mxu0 %v850
    %993 = vmatprep.subr.mxu0 %v853
    %994 = vmatpush1.msra.mxu0 %v852
    %995 = vmatprep.subr.mxu0 %v855
    %996 = vmatpush1.msra.mxu0 %v854
    %997 = vmatprep.subr.mxu0 %v857
    %998 = vmatpush1.msra.mxu0 %v856
    %999 = vmatprep.subr.mxu0 %v859
    %1000 = vmatpush1.msra.mxu0 %v858
    %1001 = vmatprep.subr.mxu0 %v861
    %1002 = vmatpush1.msra.mxu0 %v860
    %1003 = vmatprep.subr.mxu0 %v863
    %1004 = vmatpush1.msra.mxu0 %v862
    %1005 = vmatprep.subr.mxu0 %v865
    %1006 = vmatpush1.msra.mxu0 %v864
    %1007 = vmatprep.subr.mxu0 %v867
    %1008 = vmatpush1.msra.mxu0 %v866
    %1009 = vmatprep.subr.mxu0 %v869
    %1010 = vmatpush1.msra.mxu0 %v868
    %1011 = vmatprep.subr.mxu0 %v871
    %1012 = vmatpush1.msra.mxu0 %v870
    %1013 = vmatprep.subr.mxu0 %v873
    %1014 = vmatpush1.msra.mxu0 %v872
    %1015 = vmatprep.subr.mxu0 %v875
    %1016 = vmatpush1.msra.mxu0 %v874
    %1017 = vmatprep.subr.mxu0 %v877
    %1018 = vmatpush1.msra.mxu0 %v876
    %1019 = vmatprep.subr.mxu0 %v879
    %1020 = vmatpush1.msra.mxu0 %v878
    %1021 = vmatprep.subr.mxu0 %v881
    %1022 = vmatpush1.msra.mxu0 %v880
    %1023 = vmatprep.subr.mxu0 %v883
    %1024 = vmatpush1.msra.mxu0 %v882
    %1025 = vmatprep.subr.mxu0 %v885
    %1026 = vmatpush1.msra.mxu0 %v884
    %1027 = vmatprep.subr.mxu0 %v887
    %1028 = vmatpush1.msra.mxu0 %v886
    %1029 = vmatprep.subr.mxu0 %v889
    %1030 = vmatpush1.msra.mxu0 %v888
    %1031 = vmatprep.subr.mxu0 %v891
    %1032 = vmatpush1.msra.mxu0 %v890
    %1033 = vmatprep.subr.mxu0 %v893
    %1034 = vmatpush1.msra.mxu0 %v892
    %1035 = vmatprep.subr.mxu0 %v895
    %1036 = vmatpush1.msra.mxu0 %v894
    %1037 = vmatprep.subr.mxu0 %v897
    %1038 = vmatpush1.msra.mxu0 %v896
    %1039 = vmatprep.subr.mxu0 %v899
    %1040 = vmatpush1.msra.mxu0 %v898
    %1041 = vmatprep.subr.mxu0 %v901
    %1042 = vmatpush1.msra.mxu0 %v900
    %1043 = vmatprep.mubr.f32.mxu0 %v835
    %1044 = vmatmul.mubr.f32.gmra.mrb[0].mxu0 %v834
    %v1045 = vpop.f32.mrb[0].mxu0
    %v1046 = vadd.f32 %v972, %v1045
    %v1047 = vpop.f32.mrb[0].mxu0
    %v1048 = vadd.f32 %v976, %v1047
    %1049 = vdwg.mxu0
    %1050 = vmatprep.subr.mxu0 %v903
    %1051 = vmatpush1.msra.mxu0 %v902
    %1052 = vmatprep.subr.mxu0 %v905
    %1053 = vmatpush1.msra.mxu0 %v904
    %1054 = vmatprep.subr.mxu0 %v907
    %1055 = vmatpush1.msra.mxu0 %v906
    %1056 = vmatprep.subr.mxu0 %v909
    %1057 = vmatpush1.msra.mxu0 %v908
    %1058 = vmatprep.subr.mxu0 %v911
    %1059 = vmatpush1.msra.mxu0 %v910
    %1060 = vmatprep.subr.mxu0 %v913
    %1061 = vmatpush1.msra.mxu0 %v912
    %1062 = vmatprep.subr.mxu0 %v915
    %1063 = vmatpush1.msra.mxu0 %v914
    %1064 = vmatprep.subr.mxu0 %v917
    %1065 = vmatpush1.msra.mxu0 %v916
    %1066 = vmatprep.subr.mxu0 %v919
    %1067 = vmatpush1.msra.mxu0 %v918
    %1068 = vmatprep.subr.mxu0 %v921
    %1069 = vmatpush1.msra.mxu0 %v920
    %1070 = vmatprep.subr.mxu0 %v923
    %1071 = vmatpush1.msra.mxu0 %v922
    %1072 = vmatprep.subr.mxu0 %v925
    %1073 = vmatpush1.msra.mxu0 %v924
    %1074 = vmatprep.subr.mxu0 %v927
    %1075 = vmatpush1.msra.mxu0 %v926
    %1076 = vmatprep.subr.mxu0 %v929
    %1077 = vmatpush1.msra.mxu0 %v928
    %1078 = vmatprep.subr.mxu0 %v931
    %1079 = vmatpush1.msra.mxu0 %v930
    %1080 = vmatprep.subr.mxu0 %v933
    %1081 = vmatpush1.msra.mxu0 %v932
    %1082 = vmatprep.subr.mxu0 %v935
    %1083 = vmatpush1.msra.mxu0 %v934
    %1084 = vmatprep.subr.mxu0 %v937
    %1085 = vmatpush1.msra.mxu0 %v936
    %1086 = vmatprep.subr.mxu0 %v939
    %1087 = vmatpush1.msra.mxu0 %v938
    %1088 = vmatprep.subr.mxu0 %v941
    %1089 = vmatpush1.msra.mxu0 %v940
    %1090 = vmatprep.subr.mxu0 %v943
    %1091 = vmatpush1.msra.mxu0 %v942
    %1092 = vmatprep.subr.mxu0 %v945
    %1093 = vmatpush1.msra.mxu0 %v944
    %1094 = vmatprep.subr.mxu0 %v947
    %1095 = vmatpush1.msra.mxu0 %v946
    %1096 = vmatprep.subr.mxu0 %v949
    %1097 = vmatpush1.msra.mxu0 %v948
    %1098 = vmatprep.subr.mxu0 %v951
    %1099 = vmatpush1.msra.mxu0 %v950
    %1100 = vmatprep.subr.mxu0 %v953
    %1101 = vmatpush1.msra.mxu0 %v952
    %1102 = vmatprep.subr.mxu0 %v955
    %1103 = vmatpush1.msra.mxu0 %v954
    %1104 = vmatprep.subr.mxu0 %v957
    %1105 = vmatpush1.msra.mxu0 %v956
    %1106 = vmatprep.subr.mxu0 %v959
    %1107 = vmatpush1.msra.mxu0 %v958
    %1108 = vmatprep.subr.mxu0 %v961
    %1109 = vmatpush1.msra.mxu0 %v960
    %1110 = vmatprep.subr.mxu0 %v963
    %1111 = vmatpush1.msra.mxu0 %v962
    %1112 = vmatprep.subr.mxu0 %v965
    %1113 = vmatpush1.msra.mxu0 %v964
    %1114 = vmatprep.mubr.f32.mxu0 %v837
    %1115 = vmatmul.mubr.f32.gmra.mrb[0].mxu0 %v836
    %v1116 = vpop.f32.mrb[0].mxu0
    %v1117 = vadd.f32 %v1046, %v1116
    %v1118 = vpop.f32.mrb[0].mxu0
    %v1119 = vadd.f32 %v1048, %v1118
    %1120 = vdwg.mxu0
    %s1121 = scalar_lea.vmem [#allocation7], 35
    %v1122 = vld [vmem:[%s1121] ss:$8 sm:$0x3]
    %s1123 = scalar_lea.vmem [#allocation7], 67
    %v1124 = vld [vmem:[%s1123] ss:$8 sm:$0x3]
    %v1125 = vsel %vm144, %v1117, 0.0
    %v1126 = vrot.slane %v1125, 4
    %v1127 = vadd.f32 %v1125, %v1126
    %v1128 = vrot.slane %v1127, 2
    %v1129 = vadd.f32 %v1127, %v1128
    %v1130 = vrot.slane %v1129, 1
    %v1131 = vadd.f32 %v1129, %v1130
    %v1132 = vsel %vm144, %v1119, 0.0
    %v1133 = vrot.slane %v1132, 4
    %v1134 = vadd.f32 %v1132, %v1133
    %v1135 = vrot.slane %v1134, 2
    %v1136 = vadd.f32 %v1134, %v1135
    %v1137 = vrot.slane %v1136, 1
    %v1138 = vadd.f32 %v1136, %v1137
    %v1139 = vmul.f32 %v1131, %v152
    %v1140 = vmul.f32 %v1138, %v152
    %v1141 = vsub.f32 %v1117, %v1139
    %v1142 = vsub.f32 %v1119, %v1140
    %v1143 = vmul.f32 %v1141, %v1141
    %v1144 = vmul.f32 %v1142, %v1142
    %v1145 = vsel %vm144, %v1143, 0.0
    %v1146 = vrot.slane %v1145, 4
    %v1147 = vadd.f32 %v1145, %v1146
    %v1148 = vrot.slane %v1147, 2
    %v1149 = vadd.f32 %v1147, %v1148
    %v1150 = vrot.slane %v1149, 1
    %v1151 = vadd.f32 %v1149, %v1150
    %v1152 = vsel %vm144, %v1144, 0.0
    %v1153 = vrot.slane %v1152, 4
    %v1154 = vadd.f32 %v1152, %v1153
    %v1155 = vrot.slane %v1154, 2
    %v1156 = vadd.f32 %v1154, %v1155
    %v1157 = vrot.slane %v1156, 1
    %v1158 = vadd.f32 %v1156, %v1157
    %v1159 = vmul.f32 %v1151, %v152
    %v1160 = vmul.f32 %v1158, %v152
    %v1161 = vadd.f32 %v1159, 1e-05
    %v1162 = vadd.f32 %v1160, 1e-05
    %v1163 = vrsqrt.pop %v1161
    %v1164 = vrsqrt.pop %v1162
    %v1167 = vcombine.low %v1163, %v1164
    %v1169 = vunpack.c.l.s4 1966171168
    %v1170 = vunpack.c.0.s8 %v1169
    %v1171 = vlaneseq
    %v1172 = vshrl.u32 %v1171, 7
    %v1173 = vsub.s32 %v1170, %v1172
    %v1174 = vrot.slane %v1167, %v1173
    %v1176 = vunpack.c.l.s4 1966171168
    %v1177 = vunpack.c.0.s8 %v1176
    %v1178 = vlaneseq
    %v1179 = vshrl.u32 %v1178, 7
    %v1180 = vsub.s32 %v1177, %v1179
    %v1181 = vrot.slane %v1174, %v1180
    %v1183 = vmul.f32 %v1122, %v1181
    %v1185 = vlaneseq
    %v1186 = vshrl.u32 %v1185, 7
    %v1187 = vsub.s32 0, %v1186
    %v1188 = vrot.slane %v1183, %v1187
    %v1189 = vlaneseq
    %v1190 = vshrl.u32 %v1189, 7
    %v1191 = vsub.s32 1, %v1190
    %v1192 = vrot.slane %v1183, %v1191
    %v1195 = vmul.f32 %v1141, %v1188
    %v1196 = vmul.f32 %v1142, %v1192
    %v1198 = vlaneseq
    %v1199 = vshrl.u32 %v1198, 7
    %v1200 = vsub.s32 0, %v1199
    %v1201 = vrot.slane %v1124, %v1200
    %v1202 = vlaneseq
    %v1203 = vshrl.u32 %v1202, 7
    %v1204 = vsub.s32 1, %v1203
    %v1205 = vrot.slane %v1124, %v1204
    %v1208 = vadd.f32 %v1195, %v1201
    %v1209 = vadd.f32 %v1196, %v1205
    %v1210 = vmax.f32 %v1208, 0.0
    %v1211 = vmax.f32 %v1209, 0.0
    %v1212 = vld [vmem:[#allocation5 + $0x1000] sm:$0xff]
    %v1213 = vld [vmem:[#allocation5 + $0x1020] sm:$0xff]
    %v1214 = vld [vmem:[#allocation5 + $0x1040] sm:$0xff]
    %v1215 = vld [vmem:[#allocation5 + $0x1060] sm:$0xff]
    %v1216 = vld [vmem:[#allocation5 + $0x1080] sm:$0xff]
    %v1217 = vld [vmem:[#allocation5 + $0x10a0] sm:$0xff]
    %v1218 = vld [vmem:[#allocation5 + $0x10c0] sm:$0xff]
    %v1219 = vld [vmem:[#allocation5 + $0x10e0] sm:$0xff]
    %v1220 = vld [vmem:[#allocation5 + $0x1100] sm:$0xff]
    %v1221 = vld [vmem:[#allocation5 + $0x1120] sm:$0xff]
    %v1222 = vld [vmem:[#allocation5 + $0x1140] sm:$0xff]
    %v1223 = vld [vmem:[#allocation5 + $0x1160] sm:$0xff]
    %v1224 = vld [vmem:[#allocation5 + $0x1180] sm:$0xff]
    %v1225 = vld [vmem:[#allocation5 + $0x11a0] sm:$0xff]
    %v1226 = vld [vmem:[#allocation5 + $0x11c0] sm:$0xff]
    %v1227 = vld [vmem:[#allocation5 + $0x11e0] sm:$0xff]
    %v1228 = vld [vmem:[#allocation5 + $0x1200] sm:$0xff]
    %v1229 = vld [vmem:[#allocation5 + $0x1220] sm:$0xff]
    %v1230 = vld [vmem:[#allocation5 + $0x1240] sm:$0xff]
    %v1231 = vld [vmem:[#allocation5 + $0x1260] sm:$0xff]
    %v1232 = vld [vmem:[#allocation5 + $0x1280] sm:$0xff]
    %v1233 = vld [vmem:[#allocation5 + $0x12a0] sm:$0xff]
    %v1234 = vld [vmem:[#allocation5 + $0x12c0] sm:$0xff]
    %v1235 = vld [vmem:[#allocation5 + $0x12e0] sm:$0xff]
    %v1236 = vld [vmem:[#allocation5 + $0x1300] sm:$0xff]
    %v1237 = vld [vmem:[#allocation5 + $0x1320] sm:$0xff]
    %v1238 = vld [vmem:[#allocation5 + $0x1340] sm:$0xff]
    %v1239 = vld [vmem:[#allocation5 + $0x1360] sm:$0xff]
    %v1240 = vld [vmem:[#allocation5 + $0x1380] sm:$0xff]
    %v1241 = vld [vmem:[#allocation5 + $0x13a0] sm:$0xff]
    %v1242 = vld [vmem:[#allocation5 + $0x13c0] sm:$0xff]
    %v1243 = vld [vmem:[#allocation5 + $0x13e0] sm:$0xff]
    %v1244 = vld [vmem:[#allocation7 + $0x4] ss:$0 sm:$0xff]
    %1245 = vmatprep.subr.mxu0 0.0
    %1246 = vmatpush1.msra.mxu0 %v1212
    %1247 = vmatprep.subr.mxu0 0.0
    %1248 = vmatpush1.msra.mxu0 %v1213
    %1249 = vmatprep.subr.mxu0 0.0
    %1250 = vmatpush1.msra.mxu0 %v1214
    %1251 = vmatprep.subr.mxu0 0.0
    %1252 = vmatpush1.msra.mxu0 %v1215
    %1253 = vmatprep.subr.mxu0 0.0
    %1254 = vmatpush1.msra.mxu0 %v1216
    %1255 = vmatprep.subr.mxu0 0.0
    %1256 = vmatpush1.msra.mxu0 %v1217
    %1257 = vmatprep.subr.mxu0 0.0
    %1258 = vmatpush1.msra.mxu0 %v1218
    %1259 = vmatprep.subr.mxu0 0.0
    %1260 = vmatpush1.msra.mxu0 %v1219
    %1261 = vmatprep.subr.mxu0 0.0
    %1262 = vmatpush1.msra.mxu0 %v1220
    %1263 = vmatprep.subr.mxu0 0.0
    %1264 = vmatpush1.msra.mxu0 %v1221
    %1265 = vmatprep.subr.mxu0 0.0
    %1266 = vmatpush1.msra.mxu0 %v1222
    %1267 = vmatprep.subr.mxu0 0.0
    %1268 = vmatpush1.msra.mxu0 %v1223
    %1269 = vmatprep.subr.mxu0 0.0
    %1270 = vmatpush1.msra.mxu0 %v1224
    %1271 = vmatprep.subr.mxu0 0.0
    %1272 = vmatpush1.msra.mxu0 %v1225
    %1273 = vmatprep.subr.mxu0 0.0
    %1274 = vmatpush1.msra.mxu0 %v1226
    %1275 = vmatprep.subr.mxu0 0.0
    %1276 = vmatpush1.msra.mxu0 %v1227
    %1277 = vmatprep.subr.mxu0 0.0
    %1278 = vmatpush1.msra.mxu0 %v1228
    %1279 = vmatprep.subr.mxu0 0.0
    %1280 = vmatpush1.msra.mxu0 %v1229
    %1281 = vmatprep.subr.mxu0 0.0
    %1282 = vmatpush1.msra.mxu0 %v1230
    %1283 = vmatprep.subr.mxu0 0.0
    %1284 = vmatpush1.msra.mxu0 %v1231
    %1285 = vmatprep.subr.mxu0 0.0
    %1286 = vmatpush1.msra.mxu0 %v1232
    %1287 = vmatprep.subr.mxu0 0.0
    %1288 = vmatpush1.msra.mxu0 %v1233
    %1289 = vmatprep.subr.mxu0 0.0
    %1290 = vmatpush1.msra.mxu0 %v1234
    %1291 = vmatprep.subr.mxu0 0.0
    %1292 = vmatpush1.msra.mxu0 %v1235
    %1293 = vmatprep.subr.mxu0 0.0
    %1294 = vmatpush1.msra.mxu0 %v1236
    %1295 = vmatprep.subr.mxu0 0.0
    %1296 = vmatpush1.msra.mxu0 %v1237
    %1297 = vmatprep.subr.mxu0 0.0
    %1298 = vmatpush1.msra.mxu0 %v1238
    %1299 = vmatprep.subr.mxu0 0.0
    %1300 = vmatpush1.msra.mxu0 %v1239
    %1301 = vmatprep.subr.mxu0 0.0
    %1302 = vmatpush1.msra.mxu0 %v1240
    %1303 = vmatprep.subr.mxu0 0.0
    %1304 = vmatpush1.msra.mxu0 %v1241
    %1305 = vmatprep.subr.mxu0 0.0
    %1306 = vmatpush1.msra.mxu0 %v1242
    %1307 = vmatprep.subr.mxu0 0.0
    %1308 = vmatpush1.msra.mxu0 %v1243
    %1309 = vmatprep.mubr.f32.mxu0 %v1211
    %1310 = vmatmul.mubr.f32.gmra.mrb[0].mxu0 %v1210
    %v1311 = vpop.f32.mrb[0].mxu0
    %v1312 = vadd.f32 %v1244, %v1311
    %v1313 = vpop.f32.mrb[0].mxu0
    %1314 = vdwg.mxu0
    %v1315 = vld [vmem:[#allocation7 + $0x24] ss:$0 sm:$0xff]
    %v1316 = vld [vmem:[#allocation7 + $0x44] ss:$0 sm:$0xff]
    %v1317 = vsel %vm144, %v1312, 0.0
    %v1318 = vrot.slane %v1317, 4
    %v1319 = vadd.f32 %v1317, %v1318
    %v1320 = vrot.slane %v1319, 2
    %v1321 = vadd.f32 %v1319, %v1320
    %v1322 = vrot.slane %v1321, 1
    %v1323 = vadd.f32 %v1321, %v1322
    %v1324 = vmul.f32 %v1323, %v152
    %v1325 = vsub.f32 %v1312, %v1324
    %v1326 = vmul.f32 %v1325, %v1325
    %v1327 = vsel %vm144, %v1326, 0.0
    %v1328 = vrot.slane %v1327, 4
    %v1329 = vadd.f32 %v1327, %v1328
    %v1330 = vrot.slane %v1329, 2
    %v1331 = vadd.f32 %v1329, %v1330
    %v1332 = vrot.slane %v1331, 1
    %v1333 = vadd.f32 %v1331, %v1332
    %v1334 = vmul.f32 %v1333, %v152
    %v1335 = vadd.f32 %v1334, 1e-05
    %v1336 = vrsqrt.pop %v1335
    %v1337 = vmul.f32 %v1315, %v1336
    %v1338 = vmul.f32 %v1325, %v1337
    %v1339 = vadd.f32 %v1338, %v1316
    %v1340 = vmax.f32 %v1339, 0.0
    %v1341 = vld [vmem:[#allocation5 + $0x1400] sm:$0xff]
    %v1342 = vld [vmem:[#allocation5 + $0x1408] sm:$0xff]
    %v1343 = vld [vmem:[#allocation5 + $0x1420] sm:$0xff]
    %v1344 = vld [vmem:[#allocation5 + $0x1428] sm:$0xff]
    %v1345 = vld [vmem:[#allocation5 + $0x1440] sm:$0xff]
    %v1346 = vld [vmem:[#allocation5 + $0x1448] sm:$0xff]
    %v1347 = vld [vmem:[#allocation5 + $0x1460] sm:$0xff]
    %v1348 = vld [vmem:[#allocation5 + $0x1468] sm:$0xff]
    %v1349 = vld [vmem:[#allocation5 + $0x1480] sm:$0xff]
    %v1350 = vld [vmem:[#allocation5 + $0x1488] sm:$0xff]
    %v1351 = vld [vmem:[#allocation5 + $0x14a0] sm:$0xff]
    %v1352 = vld [vmem:[#allocation5 + $0x14a8] sm:$0xff]
    %v1353 = vld [vmem:[#allocation5 + $0x14c0] sm:$0xff]
    %v1354 = vld [vmem:[#allocation5 + $0x14c8] sm:$0xff]
    %v1355 = vld [vmem:[#allocation5 + $0x14e0] sm:$0xff]
    %v1356 = vld [vmem:[#allocation5 + $0x14e8] sm:$0xff]
    %v1357 = vld [vmem:[#allocation5 + $0x1500] sm:$0xff]
    %v1358 = vld [vmem:[#allocation5 + $0x1508] sm:$0xff]
    %v1359 = vld [vmem:[#allocation5 + $0x1520] sm:$0xff]
    %v1360 = vld [vmem:[#allocation5 + $0x1528] sm:$0xff]
    %v1361 = vld [vmem:[#allocation5 + $0x1540] sm:$0xff]
    %v1362 = vld [vmem:[#allocation5 + $0x1548] sm:$0xff]
    %v1363 = vld [vmem:[#allocation5 + $0x1560] sm:$0xff]
    %v1364 = vld [vmem:[#allocation5 + $0x1568] sm:$0xff]
    %v1365 = vld [vmem:[#allocation5 + $0x1580] sm:$0xff]
    %v1366 = vld [vmem:[#allocation5 + $0x1588] sm:$0xff]
    %v1367 = vld [vmem:[#allocation5 + $0x15a0] sm:$0xff]
    %v1368 = vld [vmem:[#allocation5 + $0x15a8] sm:$0xff]
    %v1369 = vld [vmem:[#allocation5 + $0x15c0] sm:$0xff]
    %v1370 = vld [vmem:[#allocation5 + $0x15c8] sm:$0xff]
    %v1371 = vld [vmem:[#allocation5 + $0x15e0] sm:$0xff]
    %v1372 = vld [vmem:[#allocation5 + $0x15e8] sm:$0xff]
    %s1373 = scalar_lea.vmem [#allocation7], 5
    %v1374 = vld [vmem:[%s1373] ss:$8 sm:$0x3]
    %v1376 = vlaneseq
    %v1377 = vshrl.u32 %v1376, 7
    %v1378 = vsub.s32 0, %v1377
    %v1379 = vrot.slane %v1374, %v1378
    %v1380 = vlaneseq
    %v1381 = vshrl.u32 %v1380, 7
    %v1382 = vsub.s32 1, %v1381
    %v1383 = vrot.slane %v1374, %v1382
    %1386 = vmatprep.subr.mxu0 %v1342
    %1387 = vmatpush1.msra.mxu0 %v1341
    %1388 = vmatprep.subr.mxu0 %v1344
    %1389 = vmatpush1.msra.mxu0 %v1343
    %1390 = vmatprep.subr.mxu0 %v1346
    %1391 = vmatpush1.msra.mxu0 %v1345
    %1392 = vmatprep.subr.mxu0 %v1348
    %1393 = vmatpush1.msra.mxu0 %v1347
    %1394 = vmatprep.subr.mxu0 %v1350
    %1395 = vmatpush1.msra.mxu0 %v1349
    %1396 = vmatprep.subr.mxu0 %v1352
    %1397 = vmatpush1.msra.mxu0 %v1351
    %1398 = vmatprep.subr.mxu0 %v1354
    %1399 = vmatpush1.msra.mxu0 %v1353
    %1400 = vmatprep.subr.mxu0 %v1356
    %1401 = vmatpush1.msra.mxu0 %v1355
    %1402 = vmatprep.subr.mxu0 %v1358
    %1403 = vmatpush1.msra.mxu0 %v1357
    %1404 = vmatprep.subr.mxu0 %v1360
    %1405 = vmatpush1.msra.mxu0 %v1359
    %1406 = vmatprep.subr.mxu0 %v1362
    %1407 = vmatpush1.msra.mxu0 %v1361
    %1408 = vmatprep.subr.mxu0 %v1364
    %1409 = vmatpush1.msra.mxu0 %v1363
    %1410 = vmatprep.subr.mxu0 %v1366
    %1411 = vmatpush1.msra.mxu0 %v1365
    %1412 = vmatprep.subr.mxu0 %v1368
    %1413 = vmatpush1.msra.mxu0 %v1367
    %1414 = vmatprep.subr.mxu0 %v1370
    %1415 = vmatpush1.msra.mxu0 %v1369
    %1416 = vmatprep.subr.mxu0 %v1372
    %1417 = vmatpush1.msra.mxu0 %v1371
    %1418 = vmatprep.subr.mxu0 0.0
    %1419 = vmatpush1.msra.mxu0 0.0
    %1420 = vmatprep.subr.mxu0 0.0
    %1421 = vmatpush1.msra.mxu0 0.0
    %1422 = vmatprep.subr.mxu0 0.0
    %1423 = vmatpush1.msra.mxu0 0.0
    %1424 = vmatprep.subr.mxu0 0.0
    %1425 = vmatpush1.msra.mxu0 0.0
    %1426 = vmatprep.subr.mxu0 0.0
    %1427 = vmatpush1.msra.mxu0 0.0
    %1428 = vmatprep.subr.mxu0 0.0
    %1429 = vmatpush1.msra.mxu0 0.0
    %1430 = vmatprep.subr.mxu0 0.0
    %1431 = vmatpush1.msra.mxu0 0.0
    %1432 = vmatprep.subr.mxu0 0.0
    %1433 = vmatpush1.msra.mxu0 0.0
    %1434 = vmatprep.subr.mxu0 0.0
    %1435 = vmatpush1.msra.mxu0 0.0
    %1436 = vmatprep.subr.mxu0 0.0
    %1437 = vmatpush1.msra.mxu0 0.0
    %1438 = vmatprep.subr.mxu0 0.0
    %1439 = vmatpush1.msra.mxu0 0.0
    %1440 = vmatprep.subr.mxu0 0.0
    %1441 = vmatpush1.msra.mxu0 0.0
    %1442 = vmatprep.subr.mxu0 0.0
    %1443 = vmatpush1.msra.mxu0 0.0
    %1444 = vmatprep.subr.mxu0 0.0
    %1445 = vmatpush1.msra.mxu0 0.0
    %1446 = vmatprep.subr.mxu0 0.0
    %1447 = vmatpush1.msra.mxu0 0.0
    %1448 = vmatprep.subr.mxu0 0.0
    %1449 = vmatpush1.msra.mxu0 0.0
    %1450 = vmatprep.mubr.f32.mxu0 0.0
    %1451 = vmatmul.mubr.f32.gmra.mrb[0].mxu0 %v1340
    %v1452 = vpop.f32.mrb[0].mxu0
    %v1453 = vadd.f32 %v1379, %v1452
    %v1454 = vpop.f32.mrb[0].mxu0
    %v1455 = vadd.f32 %v1383, %v1454
    %1456 = vdwg.mxu0
    %s1457 = scalar_lea.vmem [#allocation7], 37
    %v1458 = vld [vmem:[%s1457] ss:$8 sm:$0x3]
    %s1459 = scalar_lea.vmem [#allocation7], 69
    %v1460 = vld [vmem:[%s1459] ss:$8 sm:$0x3]
    %v1461 = vsel %vm144, %v1453, 0.0
    %v1462 = vrot.slane %v1461, 4
    %v1463 = vadd.f32 %v1461, %v1462
    %v1464 = vrot.slane %v1463, 2
    %v1465 = vadd.f32 %v1463, %v1464
    %v1466 = vrot.slane %v1465, 1
    %v1467 = vadd.f32 %v1465, %v1466
    %v1468 = vsel %vm144, %v1455, 0.0
    %v1469 = vrot.slane %v1468, 4
    %v1470 = vadd.f32 %v1468, %v1469
    %v1471 = vrot.slane %v1470, 2
    %v1472 = vadd.f32 %v1470, %v1471
    %v1473 = vrot.slane %v1472, 1
    %v1474 = vadd.f32 %v1472, %v1473
    %v1475 = vmul.f32 %v1467, %v152
    %v1476 = vmul.f32 %v1474, %v152
    %v1477 = vsub.f32 %v1453, %v1475
    %v1478 = vsub.f32 %v1455, %v1476
    %v1479 = vmul.f32 %v1477, %v1477
    %v1480 = vmul.f32 %v1478, %v1478
    %v1481 = vsel %vm144, %v1479, 0.0
    %v1482 = vrot.slane %v1481, 4
    %v1483 = vadd.f32 %v1481, %v1482
    %v1484 = vrot.slane %v1483, 2
    %v1485 = vadd.f32 %v1483, %v1484
    %v1486 = vrot.slane %v1485, 1
    %v1487 = vadd.f32 %v1485, %v1486
    %v1488 = vsel %vm144, %v1480, 0.0
    %v1489 = vrot.slane %v1488, 4
    %v1490 = vadd.f32 %v1488, %v1489
    %v1491 = vrot.slane %v1490, 2
    %v1492 = vadd.f32 %v1490, %v1491
    %v1493 = vrot.slane %v1492, 1
    %v1494 = vadd.f32 %v1492, %v1493
    %v1495 = vmul.f32 %v1487, %v152
    %v1496 = vmul.f32 %v1494, %v152
    %v1497 = vadd.f32 %v1495, 1e-05
    %v1498 = vadd.f32 %v1496, 1e-05
    %v1499 = vrsqrt.pop %v1497
    %v1500 = vrsqrt.pop %v1498
    %v1503 = vcombine.low %v1499, %v1500
    %v1505 = vunpack.c.l.s4 1966171168
    %v1506 = vunpack.c.0.s8 %v1505
    %v1507 = vlaneseq
    %v1508 = vshrl.u32 %v1507, 7
    %v1509 = vsub.s32 %v1506, %v1508
    %v1510 = vrot.slane %v1503, %v1509
    %v1512 = vunpack.c.l.s4 1966171168
    %v1513 = vunpack.c.0.s8 %v1512
    %v1514 = vlaneseq
    %v1515 = vshrl.u32 %v1514, 7
    %v1516 = vsub.s32 %v1513, %v1515
    %v1517 = vrot.slane %v1510, %v1516
    %v1519 = vmul.f32 %v1458, %v1517
    %v1521 = vlaneseq
    %v1522 = vshrl.u32 %v1521, 7
    %v1523 = vsub.s32 0, %v1522
    %v1524 = vrot.slane %v1519, %v1523
    %v1525 = vlaneseq
    %v1526 = vshrl.u32 %v1525, 7
    %v1527 = vsub.s32 1, %v1526
    %v1528 = vrot.slane %v1519, %v1527
    %v1531 = vmul.f32 %v1477, %v1524
    %v1532 = vmul.f32 %v1478, %v1528
    %v1534 = vlaneseq
    %v1535 = vshrl.u32 %v1534, 7
    %v1536 = vsub.s32 0, %v1535
    %v1537 = vrot.slane %v1460, %v1536
    %v1538 = vlaneseq
    %v1539 = vshrl.u32 %v1538, 7
    %v1540 = vsub.s32 1, %v1539
    %v1541 = vrot.slane %v1460, %v1540
    %v1544 = vadd.f32 %v1531, %v1537
    %v1545 = vadd.f32 %v1532, %v1541
    %v1546 = vmax.f32 %v1544, 0.0
    %v1547 = vmax.f32 %v1545, 0.0
    %v1548 = vld [vmem:[#allocation5 + $0x1600] sm:$0xff]
    %v1549 = vld [vmem:[#allocation5 + $0x1620] sm:$0xff]
    %v1550 = vld [vmem:[#allocation5 + $0x1640] sm:$0xff]
    %v1551 = vld [vmem:[#allocation5 + $0x1660] sm:$0xff]
    %v1552 = vld [vmem:[#allocation5 + $0x1680] sm:$0xff]
    %v1553 = vld [vmem:[#allocation5 + $0x16a0] sm:$0xff]
    %v1554 = vld [vmem:[#allocation5 + $0x16c0] sm:$0xff]
    %v1555 = vld [vmem:[#allocation5 + $0x16e0] sm:$0xff]
    %v1556 = vld [vmem:[#allocation5 + $0x1700] sm:$0xff]
    %v1557 = vld [vmem:[#allocation5 + $0x1720] sm:$0xff]
    %v1558 = vld [vmem:[#allocation5 + $0x1740] sm:$0xff]
    %v1559 = vld [vmem:[#allocation5 + $0x1760] sm:$0xff]
    %v1560 = vld [vmem:[#allocation5 + $0x1780] sm:$0xff]
    %v1561 = vld [vmem:[#allocation5 + $0x17a0] sm:$0xff]
    %v1562 = vld [vmem:[#allocation5 + $0x17c0] sm:$0xff]
    %v1563 = vld [vmem:[#allocation5 + $0x17e0] sm:$0xff]
    %v1564 = vld [vmem:[#allocation5 + $0x1800] sm:$0xff]
    %v1565 = vld [vmem:[#allocation5 + $0x1820] sm:$0xff]
    %v1566 = vld [vmem:[#allocation5 + $0x1840] sm:$0xff]
    %v1567 = vld [vmem:[#allocation5 + $0x1860] sm:$0xff]
    %v1568 = vld [vmem:[#allocation5 + $0x1880] sm:$0xff]
    %v1569 = vld [vmem:[#allocation5 + $0x18a0] sm:$0xff]
    %v1570 = vld [vmem:[#allocation5 + $0x18c0] sm:$0xff]
    %v1571 = vld [vmem:[#allocation5 + $0x18e0] sm:$0xff]
    %v1572 = vld [vmem:[#allocation5 + $0x1900] sm:$0xff]
    %v1573 = vld [vmem:[#allocation5 + $0x1920] sm:$0xff]
    %v1574 = vld [vmem:[#allocation5 + $0x1940] sm:$0xff]
    %v1575 = vld [vmem:[#allocation5 + $0x1960] sm:$0xff]
    %v1576 = vld [vmem:[#allocation5 + $0x1980] sm:$0xff]
    %v1577 = vld [vmem:[#allocation5 + $0x19a0] sm:$0xff]
    %v1578 = vld [vmem:[#allocation5 + $0x19c0] sm:$0xff]
    %v1579 = vld [vmem:[#allocation5 + $0x19e0] sm:$0xff]
    %v1580 = vld [vmem:[#allocation7 + $0x6] ss:$0 sm:$0xff]
    %1581 = vmatprep.subr.mxu0 0.0
    %1582 = vmatpush1.msra.mxu0 %v1548
    %1583 = vmatprep.subr.mxu0 0.0
    %1584 = vmatpush1.msra.mxu0 %v1549
    %1585 = vmatprep.subr.mxu0 0.0
    %1586 = vmatpush1.msra.mxu0 %v1550
    %1587 = vmatprep.subr.mxu0 0.0
    %1588 = vmatpush1.msra.mxu0 %v1551
    %1589 = vmatprep.subr.mxu0 0.0
    %1590 = vmatpush1.msra.mxu0 %v1552
    %1591 = vmatprep.subr.mxu0 0.0
    %1592 = vmatpush1.msra.mxu0 %v1553
    %1593 = vmatprep.subr.mxu0 0.0
    %1594 = vmatpush1.msra.mxu0 %v1554
    %1595 = vmatprep.subr.mxu0 0.0
    %1596 = vmatpush1.msra.mxu0 %v1555
    %1597 = vmatprep.subr.mxu0 0.0
    %1598 = vmatpush1.msra.mxu0 %v1556
    %1599 = vmatprep.subr.mxu0 0.0
    %1600 = vmatpush1.msra.mxu0 %v1557
    %1601 = vmatprep.subr.mxu0 0.0
    %1602 = vmatpush1.msra.mxu0 %v1558
    %1603 = vmatprep.subr.mxu0 0.0
    %1604 = vmatpush1.msra.mxu0 %v1559
    %1605 = vmatprep.subr.mxu0 0.0
    %1606 = vmatpush1.msra.mxu0 %v1560
    %1607 = vmatprep.subr.mxu0 0.0
    %1608 = vmatpush1.msra.mxu0 %v1561
    %1609 = vmatprep.subr.mxu0 0.0
    %1610 = vmatpush1.msra.mxu0 %v1562
    %1611 = vmatprep.subr.mxu0 0.0
    %1612 = vmatpush1.msra.mxu0 %v1563
    %1613 = vmatprep.subr.mxu0 0.0
    %1614 = vmatpush1.msra.mxu0 %v1564
    %1615 = vmatprep.subr.mxu0 0.0
    %1616 = vmatpush1.msra.mxu0 %v1565
    %1617 = vmatprep.subr.mxu0 0.0
    %1618 = vmatpush1.msra.mxu0 %v1566
    %1619 = vmatprep.subr.mxu0 0.0
    %1620 = vmatpush1.msra.mxu0 %v1567
    %1621 = vmatprep.subr.mxu0 0.0
    %1622 = vmatpush1.msra.mxu0 %v1568
    %1623 = vmatprep.subr.mxu0 0.0
    %1624 = vmatpush1.msra.mxu0 %v1569
    %1625 = vmatprep.subr.mxu0 0.0
    %1626 = vmatpush1.msra.mxu0 %v1570
    %1627 = vmatprep.subr.mxu0 0.0
    %1628 = vmatpush1.msra.mxu0 %v1571
    %1629 = vmatprep.subr.mxu0 0.0
    %1630 = vmatpush1.msra.mxu0 %v1572
    %1631 = vmatprep.subr.mxu0 0.0
    %1632 = vmatpush1.msra.mxu0 %v1573
    %1633 = vmatprep.subr.mxu0 0.0
    %1634 = vmatpush1.msra.mxu0 %v1574
    %1635 = vmatprep.subr.mxu0 0.0
    %1636 = vmatpush1.msra.mxu0 %v1575
    %1637 = vmatprep.subr.mxu0 0.0
    %1638 = vmatpush1.msra.mxu0 %v1576
    %1639 = vmatprep.subr.mxu0 0.0
    %1640 = vmatpush1.msra.mxu0 %v1577
    %1641 = vmatprep.subr.mxu0 0.0
    %1642 = vmatpush1.msra.mxu0 %v1578
    %1643 = vmatprep.subr.mxu0 0.0
    %1644 = vmatpush1.msra.mxu0 %v1579
    %1645 = vmatprep.mubr.f32.mxu0 %v1547
    %1646 = vmatmul.mubr.f32.gmra.mrb[0].mxu0 %v1546
    %v1647 = vpop.f32.mrb[0].mxu0
    %v1648 = vadd.f32 %v1580, %v1647
    %v1649 = vpop.f32.mrb[0].mxu0
    %1650 = vdwg.mxu0
    %v1651 = vld [vmem:[#allocation7 + $0x26] ss:$0 sm:$0xff]
    %v1652 = vld [vmem:[#allocation7 + $0x46] ss:$0 sm:$0xff]
    %v1653 = vsel %vm144, %v1648, 0.0
    %v1654 = vrot.slane %v1653, 4
    %v1655 = vadd.f32 %v1653, %v1654
    %v1656 = vrot.slane %v1655, 2
    %v1657 = vadd.f32 %v1655, %v1656
    %v1658 = vrot.slane %v1657, 1
    %v1659 = vadd.f32 %v1657, %v1658
    %v1660 = vmul.f32 %v1659, %v152
    %v1661 = vsub.f32 %v1648, %v1660
    %v1662 = vmul.f32 %v1661, %v1661
    %v1663 = vsel %vm144, %v1662, 0.0
    %v1664 = vrot.slane %v1663, 4
    %v1665 = vadd.f32 %v1663, %v1664
    %v1666 = vrot.slane %v1665, 2
    %v1667 = vadd.f32 %v1665, %v1666
    %v1668 = vrot.slane %v1667, 1
    %v1669 = vadd.f32 %v1667, %v1668
    %v1670 = vmul.f32 %v1669, %v152
    %v1671 = vadd.f32 %v1670, 1e-05
    %v1672 = vrsqrt.pop %v1671
    %v1673 = vmul.f32 %v1651, %v1672
    %v1674 = vmul.f32 %v1661, %v1673
    %v1675 = vadd.f32 %v1674, %v1652
    %v1676 = vmax.f32 %v1675, 0.0
    %v1677 = vld [vmem:[#allocation5 + $0x1a00] sm:$0xff]
    %v1678 = vld [vmem:[#allocation5 + $0x1a20] sm:$0xff]
    %v1679 = vld [vmem:[#allocation5 + $0x1a40] sm:$0xff]
    %v1680 = vld [vmem:[#allocation5 + $0x1a60] sm:$0xff]
    %v1681 = vld [vmem:[#allocation5 + $0x1a80] sm:$0xff]
    %v1682 = vld [vmem:[#allocation5 + $0x1aa0] sm:$0xff]
    %v1683 = vld [vmem:[#allocation5 + $0x1ac0] sm:$0xff]
    %v1684 = vld [vmem:[#allocation5 + $0x1ae0] sm:$0xff]
    %v1685 = vld [vmem:[#allocation5 + $0x1b00] sm:$0xff]
    %v1686 = vld [vmem:[#allocation5 + $0x1b20] sm:$0xff]
    %v1687 = vld [vmem:[#allocation5 + $0x1b40] sm:$0xff]
    %v1688 = vld [vmem:[#allocation5 + $0x1b60] sm:$0xff]
    %v1689 = vld [vmem:[#allocation5 + $0x1b80] sm:$0xff]
    %v1690 = vld [vmem:[#allocation5 + $0x1ba0] sm:$0xff]
    %v1691 = vld [vmem:[#allocation5 + $0x1bc0] sm:$0xff]
    %v1692 = vld [vmem:[#allocation5 + $0x1be0] sm:$0xff]
    %v1693 = vld [vmem:[#allocation7 + $0x7] ss:$0 sm:$0xff]
    %1694 = vmatprep.subr.mxu0 0.0
    %1695 = vmatpush1.msra.mxu0 %v1677
    %1696 = vmatprep.subr.mxu0 0.0
    %1697 = vmatpush1.msra.mxu0 %v1678
    %1698 = vmatprep.subr.mxu0 0.0
    %1699 = vmatpush1.msra.mxu0 %v1679
    %1700 = vmatprep.subr.mxu0 0.0
    %1701 = vmatpush1.msra.mxu0 %v1680
    %1702 = vmatprep.subr.mxu0 0.0
    %1703 = vmatpush1.msra.mxu0 %v1681
    %1704 = vmatprep.subr.mxu0 0.0
    %1705 = vmatpush1.msra.mxu0 %v1682
    %1706 = vmatprep.subr.mxu0 0.0
    %1707 = vmatpush1.msra.mxu0 %v1683
    %1708 = vmatprep.subr.mxu0 0.0
    %1709 = vmatpush1.msra.mxu0 %v1684
    %1710 = vmatprep.subr.mxu0 0.0
    %1711 = vmatpush1.msra.mxu0 %v1685
    %1712 = vmatprep.subr.mxu0 0.0
    %1713 = vmatpush1.msra.mxu0 %v1686
    %1714 = vmatprep.subr.mxu0 0.0
    %1715 = vmatpush1.msra.mxu0 %v1687
    %1716 = vmatprep.subr.mxu0 0.0
    %1717 = vmatpush1.msra.mxu0 %v1688
    %1718 = vmatprep.subr.mxu0 0.0
    %1719 = vmatpush1.msra.mxu0 %v1689
    %1720 = vmatprep.subr.mxu0 0.0
    %1721 = vmatpush1.msra.mxu0 %v1690
    %1722 = vmatprep.subr.mxu0 0.0
    %1723 = vmatpush1.msra.mxu0 %v1691
    %1724 = vmatprep.subr.mxu0 0.0
    %1725 = vmatpush1.msra.mxu0 %v1692
    %1726 = vmatprep.subr.mxu0 0.0
    %1727 = vmatpush1.msra.mxu0 0.0
    %1728 = vmatprep.subr.mxu0 0.0
    %1729 = vmatpush1.msra.mxu0 0.0
    %1730 = vmatprep.subr.mxu0 0.0
    %1731 = vmatpush1.msra.mxu0 0.0
    %1732 = vmatprep.subr.mxu0 0.0
    %1733 = vmatpush1.msra.mxu0 0.0
    %1734 = vmatprep.subr.mxu0 0.0
    %1735 = vmatpush1.msra.mxu0 0.0
    %1736 = vmatprep.subr.mxu0 0.0
    %1737 = vmatpush1.msra.mxu0 0.0
    %1738 = vmatprep.subr.mxu0 0.0
    %1739 = vmatpush1.msra.mxu0 0.0
    %1740 = vmatprep.subr.mxu0 0.0
    %1741 = vmatpush1.msra.mxu0 0.0
    %1742 = vmatprep.subr.mxu0 0.0
    %1743 = vmatpush1.msra.mxu0 0.0
    %1744 = vmatprep.subr.mxu0 0.0
    %1745 = vmatpush1.msra.mxu0 0.0
    %1746 = vmatprep.subr.mxu0 0.0
    %1747 = vmatpush1.msra.mxu0 0.0
    %1748 = vmatprep.subr.mxu0 0.0
    %1749 = vmatpush1.msra.mxu0 0.0
    %1750 = vmatprep.subr.mxu0 0.0
    %1751 = vmatpush1.msra.mxu0 0.0
    %1752 = vmatprep.subr.mxu0 0.0
    %1753 = vmatpush1.msra.mxu0 0.0
    %1754 = vmatprep.subr.mxu0 0.0
    %1755 = vmatpush1.msra.mxu0 0.0
    %1756 = vmatprep.subr.mxu0 0.0
    %1757 = vmatpush1.msra.mxu0 0.0
    %1758 = vmatprep.mubr.f32.mxu0 0.0
    %1759 = vmatmul.mubr.f32.gmra.mrb[0].mxu0 %v1676
    %v1760 = vpop.f32.mrb[0].mxu0
    %v1761 = vadd.f32 %v1693, %v1760
    %v1762 = vpop.f32.mrb[0].mxu0
    %1763 = vdwg.mxu0
    %1764 = vst [vmem:[#allocation8] sm:$0xf] %v1761
    // Predicated region
    $region26: #{tpu_custom_call.1} parent=1 // pred_check
      _
    $region27: #{tpu_custom_call.1} parent=1 // pred_check_branch
      %1766 = sbr.rel (0) target = $region29
    $region28: #{tpu_custom_call.1} parent=1 // pred_region
      %s1768 = ssub.s32 64, 64
      %1769 = vsyncadd [#allocation4], %s1768
      %s1771 = sshll.u32 [#allocation8], 4
      %s1772 = int_to_ptr.vmem [resolvable:$true] %s1771
      %1774 = dma.vmem_to_hbm [thread:$0]  %s1772, 64, %s3, [#allocation4]
    $region29: #{tpu_custom_call.1} parent=1 // pred_fallthru
      _
    // Predicated region
    $region30: #{tpu_custom_call.1} parent=1 // pred_check
      _
    $region31: #{tpu_custom_call.1} parent=1 // pred_check_branch
      %1776 = sbr.rel (0) target = $region33
    $region32: #{tpu_custom_call.1} parent=1 // pred_region
      %1777 = dma.done [#allocation4], 64
    $region33: #{tpu_custom_call.1} parent=1 // pred_fallthru
      _
    %1778 = vsyncpa [#allocation3], 1
    %1779 = vsyncpa [#allocation6], 1
    %1780 = vsyncpa [#allocation4], 1

</llo_original>
